<compile_context>
chip_gen: v5e
topology: v5e:2x2
jax: 0.10.0
libtpu: 0.0.40
codegen_flags: <defaults>
</compile_context>

<pallas_src>
import functools

import jax
import jax.numpy as jnp
import numpy as np
from jax.experimental import pallas as pl
from jax.experimental.pallas import tpu as pltpu


# ----------------------------------------------------------------------------- kernel

def bigru_kernel(x_ref, wg_ref, bg_ref, w3_ref, hd_ref, out_ref, gx_ref, *, Bp, T, H, G2):
    """x_ref : (T*Bp, I) time-major, batch padded to Bp rows.
    wg_ref : (I+G2, 3*G2) bf16 = [W_x (folded lin1*lin2*W_ih, both dirs) ; W_hh block-diag].
    bg_ref : (2, 3*G2) f32   = [b_x (with b_hh r/z folded) ; b_hn padded].
    w3_ref : (G2, H)  f32      linear3 weight, zero rows in the padded lanes.
    hd_ref : (3, H)   f32    = [b3 ; w4 row ; b4 padded].
    gx_ref : (T, Bp, 3*G2) f32 VMEM scratch holding the direction-merged gate inputs."""
    I = x_ref.shape[1]
    GW = 3 * G2

    w_x = wg_ref[0:I, :]                  # (I, GW)   bf16
    w_h = wg_ref[I:I + G2, :]             # (G2, GW)  bf16, block-diagonal
    b_x = bg_ref[0:1, :]                  # (1, GW)   f32
    b_hn = bg_ref[1:2, 0:G2]              # (1, G2)   f32

    # One-shot input->gates projection for both directions and all timesteps (bf16 MXU,
    # f32 accumulation).  Off the serial critical path.
    gx = jnp.dot(x_ref[...].astype(jnp.bfloat16), w_x,
                 preferred_element_type=jnp.float32) + b_x            # (T*Bp, GW)

    # Stage time-major and pre-merge the two directions: within each 128-lane gate group,
    # lanes [0:H] are the forward direction (consumes time t) and [H:2H] the backward
    # direction (consumes time T-1-t).  Doing the select here removes one VMEM load and one
    # lane select from every serial step.  Each store is a full-sublane (Bp=8), lane-aligned
    # (GW multiple of 128) tile.  TODO(synk): for long T, fold this into a T-tiled pipeline.
    lane = jax.lax.broadcasted_iota(jnp.int32, (Bp, GW), 1)
    take_fwd = (lane % G2) < H
    for t in range(T):
        fwd = gx[t * Bp:(t + 1) * Bp, :]
        bwd = gx[(T - 1 - t) * Bp:(T - t) * Bp, :]
        gx_ref[t] = jnp.where(take_fwd, fwd, bwd)

    def step(t, h):
        gi = gx_ref[t]                                                 # (Bp, GW), single load
        # w_h is loop-invariant; Mosaic keeps it resident across the unrolled steps
        # (explicit pltpu.matmul_push_rhs residency not needed at this size).
        gh = jnp.dot(h.astype(jnp.bfloat16), w_h,
                     preferred_element_type=jnp.float32)               # (Bp, GW)
        rz = jax.nn.sigmoid(gi[:, :2 * G2] + gh[:, :2 * G2])           # r|z, both dirs
        r = rz[:, :G2]                                                 # 128-aligned slices
        z = rz[:, G2:]
        n = jnp.tanh(gi[:, 2 * G2:] + r * (gh[:, 2 * G2:] + b_hn))
        return (1.0 - z) * n + z * h                                   # pad lanes stay 0

    h0 = jnp.zeros((Bp, G2), jnp.float32)
    # Full unroll is right for small T; bound it (e.g. unroll=8) for long sequences.
    h = jax.lax.fori_loop(0, T, step, h0, unroll=True)    # h == [h_fwd | h_bwd | 0-pad]

    # Head: relu(linear3) on the padded state (zero weight rows in the pad lanes), then
    # linear4 as a VPU/XLU dot product (avoids a 1-column MXU matmul in the epilogue).
    y = jnp.maximum(
        jnp.dot(h, w3_ref[...], preferred_element_type=jnp.float32) + hd_ref[0:1, :], 0.0)
    out_ref[...] = jnp.sum(y * hd_ref[1:2, :], axis=-1, keepdims=True) + hd_ref[2:3, 0:1]


# ----------------------------------------------------------------------------- host-side packing

def pack_params(params, H, G2):
    """Fold linear1/linear2 into the GRU input projections, fold the r/z hidden biases into
    the input bias, and pack everything into 4 arrays with a gate-grouped, direction-paired,
    128-lane-aligned column layout."""
    hp = jax.lax.Precision.HIGHEST            # one-time fold, full f32 accuracy
    dot = lambda a, b: jnp.dot(a, b, precision=hp)

    # linear1 -> linear2 as a single affine map (exact: no nonlinearity between them).
    w12 = dot(params["w1_t"], params["w2_t"])                        # (I, I)
    b12 = dot(params["b1"], params["w2_t"]) + params["b2"]           # (1, I)

    # Fold into each direction's input->hidden projection.
    wf = dot(w12, params["wih_f_t"]); bf = dot(b12, params["wih_f_t"]) + params["bih_f"]
    wb = dot(w12, params["wih_b_t"]); bb = dot(b12, params["wih_b_t"]) + params["bih_b"]
    I = wf.shape[0]
    pad = G2 - 2 * H

    def group_cols(f, b):
        # per-direction [r z n] columns -> [ r_f r_b 0 | z_f z_b 0 | n_f n_b 0 ], width 3*G2
        rows = f.shape[0]
        blocks = []
        for g in range(3):
            blocks += [f[:, g * H:(g + 1) * H], b[:, g * H:(g + 1) * H],
                       jnp.zeros((rows, pad), jnp.float32)]
        return jnp.concatenate(blocks, axis=-1)

    w_x = group_cols(wf, wb)                                         # (I, 3*G2)
    b_x = group_cols(bf, bb)                                         # (1, 3*G2)

    # Fold b_hh for r and z into b_x (adds linearly inside the sigmoid); b_hn must stay
    # inside the r*(...) term and is kept separately.
    b_hh = group_cols(params["bhh_f"], params["bhh_b"])              # (1, 3*G2)
    b_x = b_x.at[:, :2 * G2].add(b_hh[:, :2 * G2])
    b_hn = b_hh[:, 2 * G2:]                                          # (1, G2)

    # Block-diagonal hidden->gates; rows follow the carried state layout [h_f | h_b | 0-pad].
    w_h = jnp.zeros((G2, 3 * G2), jnp.float32)
    for g in range(3):
        w_h = w_h.at[0:H, g * G2:g * G2 + H].set(params["whh_f_t"][:, g * H:(g + 1) * H])
        w_h = w_h.at[H:2 * H, g * G2 + H:g * G2 + 2 * H].set(
            params["whh_b_t"][:, g * H:(g + 1) * H])

    w_gate = jnp.concatenate([w_x, w_h], axis=0).astype(jnp.bfloat16)          # (I+G2, 3*G2)
    b_gate = jnp.concatenate([b_x, jnp.pad(b_hn, ((0, 0), (0, 2 * G2)))], 0)   # (2, 3*G2)

    w3p = jnp.zeros((G2, H), jnp.float32).at[0:2 * H, :].set(params["w3_t"])   # (G2, H)
    head = jnp.concatenate([params["b3"],
                            params["w4_t"].reshape(1, H),
                            jnp.pad(params["b4"], ((0, 0), (0, H - 1)))], 0)   # (3, H)
    return w_gate, b_gate, w3p, head


def bigru_forward(x, params):
    """x: (B, T, I) float32 (batch_first, as in the PyTorch module). Returns (B, 1)."""
    B, T, I = x.shape
    H = params["whh_f_t"].shape[0]
    G2 = ((2 * H + 127) // 128) * 128      # direction-pair gate group width, 128-lane aligned
    Bp = max(8, ((B + 7) // 8) * 8)        # full f32 sublanes

    w_gate, b_gate, w3p, head = pack_params(params, H, G2)

    # time-major, batch-padded flatten: row t*Bp + b holds timestep t of batch element b
    xp = jnp.zeros((T, Bp, I), jnp.float32).at[:, :B, :].set(jnp.transpose(x, (1, 0, 2)))
    x_flat = xp.reshape(T * Bp, I)

    vmem = pl.BlockSpec(memory_space=pltpu.MemorySpace.VMEM)
    # Gridless single invocation is right at this size.  TODO(synk): at production sizes add a
    # batch-tile grid (dimension_semantics=("parallel",)) for v7x's 2 TCs and T-tile the gx
    # phase so the x DMA overlaps the projection matmul and the scratch fits v7x's 64 MiB VMEM.
    out = pl.pallas_call(
        functools.partial(bigru_kernel, Bp=Bp, T=T, H=H, G2=G2),
        out_shape=jax.ShapeDtypeStruct((Bp, 1), jnp.float32),
        in_specs=[vmem] * 5,
        out_specs=vmem,
        scratch_shapes=[pltpu.VMEM((T, Bp, 3 * G2), jnp.float32)],
    )(x_flat, w_gate, b_gate, w3p, head)
    return out[:B]


# ----------------------------------------------------------------------------- pure-JAX reference

def _gru_direction_ref(gates_x, whh_t, bhh, B, T, H, reverse):
    h = jnp.zeros((B, H), jnp.float32)
    steps = range(T - 1, -1, -1) if reverse else range(T)
    for t in steps:
        gi = gates_x[t * B:(t + 1) * B, :]
        gh = h @ whh_t + bhh
        r = jax.nn.sigmoid(gi[:, :H] + gh[:, :H])
        zg = jax.nn.sigmoid(gi[:, H:2 * H] + gh[:, H:2 * H])
        n = jnp.tanh(gi[:, 2 * H:] + r * gh[:, 2 * H:])
        h = (1.0 - zg) * n + zg * h
    return h


def ref_forward(x, params):
    """Pure-JAX reference with the original (unfolded, per-direction, f32) math."""
    B, T, I = x.shape
    H = params["whh_f_t"].shape[0]
    xf = jnp.transpose(x, (1, 0, 2)).reshape(T * B, I)
    xf = xf @ params["w1_t"] + params["b1"]
    xf = xf @ params["w2_t"] + params["b2"]
    gx_f = xf @ params["wih_f_t"] + params["bih_f"]
    gx_b = xf @ params["wih_b_t"] + params["bih_b"]
    h_f = _gru_direction_ref(gx_f, params["whh_f_t"], params["bhh_f"], B, T, H, False)
    h_b = _gru_direction_ref(gx_b, params["whh_b_t"], params["bhh_b"], B, T, H, True)
    hn = jnp.concatenate([h_f, h_b], axis=-1)            # == h_n.transpose(0,1).flatten(1)
    y = jnp.maximum(hn @ params["w3_t"] + params["b3"], 0.0)
    return y @ params["w4_t"] + params["b4"]


def init_params(key, input_size, hidden_size):
    I, H = input_size, hidden_size
    ks = jax.random.split(key, 16)

    def u(k, shape, fan):
        bound = 1.0 / np.sqrt(fan)
        return jax.random.uniform(k, shape, jnp.float32, -bound, bound)

    # stored pre-transposed: (in_features, out_features); biases as (1, out)
    return {
        "w1_t": u(ks[0], (I, I), I),   "b1": u(ks[1], (1, I), I),
        "w2_t": u(ks[2], (I, I), I),   "b2": u(ks[3], (1, I), I),
        "wih_f_t": u(ks[4], (I, 3 * H), H), "bih_f": u(ks[5], (1, 3 * H), H),
        "whh_f_t": u(ks[6], (H, 3 * H), H), "bhh_f": u(ks[7], (1, 3 * H), H),
        "wih_b_t": u(ks[8], (I, 3 * H), H), "bih_b": u(ks[9], (1, 3 * H), H),
        "whh_b_t": u(ks[10], (H, 3 * H), H), "bhh_b": u(ks[11], (1, 3 * H), H),
        "w3_t": u(ks[12], (2 * H, H), 2 * H), "b3": u(ks[13], (1, H), 2 * H),
        "w4_t": u(ks[14], (H, 1), H),  "b4": u(ks[15], (1, 1), H),
    }


if __name__ == "__main__":
    B, T, I, H = 2, 8, 32, 32  # num_layers = 1 (required for the head shapes to match)

    key = jax.random.PRNGKey(0)
    kx, kp = jax.random.split(key)
    x = jax.random.normal(kx, (B, T, I), jnp.float32)
    params = init_params(kp, I, H)

    out = jax.block_until_ready(bigru_forward(x, params))
    ref = ref_forward(x, params)

    # Tolerance covers (a) fp32 reassociation from folding linear1/linear2 into the gate
    # projection and (b) bf16 MXU operands (f32 accumulation) in the gate matmuls, whose
    # rounding is carried through the T-step recurrence.
    np.testing.assert_allclose(np.asarray(out), np.asarray(ref), rtol=2e-2, atol=2e-2)
    assert out.shape == (B, 1)
    print("KERNEL_OK")
</pallas_src>

<mosaic_0001>
module attributes {stable_mosaic.version = 11 : i64} {
  func.func @bigru_kernel(%arg0: memref<64x32xf32, #tpu.memory_space<vmem>>, %arg1: memref<160x384xbf16, #tpu.memory_space<vmem>>, %arg2: memref<2x384xf32, #tpu.memory_space<vmem>>, %arg3: memref<128x32xf32, #tpu.memory_space<vmem>>, %arg4: memref<3x32xf32, #tpu.memory_space<vmem>>, %arg5: memref<8x1xf32, #tpu.memory_space<vmem>>, %arg6: memref<8x8x384xf32, #tpu.memory_space<vmem>>) attributes {dimension_semantics = [], scalar_prefetch = 0 : i64, scratch_operands = 1 : i64, tpu.core_type = #tpu.core_type<tc>} {
    %c0 = arith.constant 0 : index
    %c0_0 = arith.constant 0 : index
    %0 = vector.load %arg1[%c0, %c0_0] : memref<160x384xbf16, #tpu.memory_space<vmem>>, vector<32x384xbf16>
    %c32 = arith.constant 32 : index
    %c0_1 = arith.constant 0 : index
    %1 = vector.load %arg1[%c32, %c0_1] : memref<160x384xbf16, #tpu.memory_space<vmem>>, vector<128x384xbf16>
    %c0_2 = arith.constant 0 : index
    %c0_3 = arith.constant 0 : index
    %2 = vector.load %arg2[%c0_2, %c0_3] : memref<2x384xf32, #tpu.memory_space<vmem>>, vector<1x384xf32>
    %c1 = arith.constant 1 : index
    %c0_4 = arith.constant 0 : index
    %3 = vector.load %arg2[%c1, %c0_4] : memref<2x384xf32, #tpu.memory_space<vmem>>, vector<1x128xf32>
    %c0_5 = arith.constant 0 : index
    %c0_6 = arith.constant 0 : index
    %4 = vector.load %arg0[%c0_5, %c0_6] : memref<64x32xf32, #tpu.memory_space<vmem>>, vector<64x32xf32>
    %5 = arith.truncf %4 : vector<64x32xf32> to vector<64x32xbf16>
    %cst = arith.constant dense<0.000000e+00> : vector<64x384xf32>
    %6 = tpu.matmul %5, %0, %cst {dimension_numbers = #tpu.dot_dimension_numbers<[1], [0], [0], [1], [0, 0, 1, 1], [], []>} : vector<64x32xbf16>, vector<32x384xbf16>, vector<64x384xf32> -> vector<64x384xf32>
    %7 = vector.broadcast %2 : vector<1x384xf32> to vector<64x384xf32>
    %8 = arith.addf %6, %7 : vector<64x384xf32>
    %9 = tpu.iota {dimensions = array<i32: 1>} : vector<8x384xi32>
    %c128_i32 = arith.constant 128 : i32
    %c0_i32 = arith.constant 0 : i32
    %10 = arith.cmpi eq, %c128_i32, %c0_i32 : i32
    %c1_i32 = arith.constant 1 : i32
    %11 = arith.select %10, %c1_i32, %c128_i32 : i32
    %12 = vector.broadcast %11 : i32 to vector<8x384xi32>
    %13 = arith.remsi %9, %12 : vector<8x384xi32>
    %c0_i32_7 = arith.constant 0 : i32
    %14 = vector.broadcast %c0_i32_7 : i32 to vector<8x384xi32>
    %15 = arith.cmpi ne, %13, %14 : vector<8x384xi32>
    %c0_i32_8 = arith.constant 0 : i32
    %16 = vector.broadcast %c0_i32_8 : i32 to vector<8x384xi32>
    %17 = arith.cmpi slt, %13, %16 : vector<8x384xi32>
    %c0_i32_9 = arith.constant 0 : i32
    %18 = arith.cmpi slt, %11, %c0_i32_9 : i32
    %19 = vector.broadcast %18 : i1 to vector<8x384xi1>
    %20 = vector.broadcast %19 : vector<8x384xi1> to vector<8x384xi1>
    %21 = arith.xori %17, %20 : vector<8x384xi1>
    %22 = arith.andi %21, %15 : vector<8x384xi1>
    %23 = vector.broadcast %11 : i32 to vector<8x384xi32>
    %24 = arith.addi %13, %23 : vector<8x384xi32>
    %25 = arith.select %22, %24, %13 : vector<8x384xi1>, vector<8x384xi32>
    %c32_i32 = arith.constant 32 : i32
    %26 = vector.broadcast %c32_i32 : i32 to vector<8x384xi32>
    %27 = arith.cmpi slt, %25, %26 : vector<8x384xi32>
    %28 = vector.extract_strided_slice %8 {offsets = [0, 0], sizes = [8, 384], strides = [1, 1]} : vector<64x384xf32> to vector<8x384xf32>
    %29 = vector.extract_strided_slice %8 {offsets = [56, 0], sizes = [8, 384], strides = [1, 1]} : vector<64x384xf32> to vector<8x384xf32>
    %30 = arith.select %27, %28, %29 : vector<8x384xi1>, vector<8x384xf32>
    %c0_10 = arith.constant 0 : index
    %c0_11 = arith.constant 0 : index
    %c0_12 = arith.constant 0 : index
    %31 = vector.load %arg6[%c0_10, %c0_11, %c0_12] : memref<8x8x384xf32, #tpu.memory_space<vmem>>, vector<1x8x384xf32>
    %32 = vector.shape_cast %31 : vector<1x8x384xf32> to vector<8x384xf32>
    %33 = vector.shape_cast %30 : vector<8x384xf32> to vector<1x8x384xf32>
    tpu.vector_store %arg6[%c0_10, %c0_11, %c0_12], %33 {strides = array<i32>} : memref<8x8x384xf32, #tpu.memory_space<vmem>>, vector<1x8x384xf32>,
    %34 = vector.extract_strided_slice %8 {offsets = [8, 0], sizes = [8, 384], strides = [1, 1]} : vector<64x384xf32> to vector<8x384xf32>
    %35 = vector.extract_strided_slice %8 {offsets = [48, 0], sizes = [8, 384], strides = [1, 1]} : vector<64x384xf32> to vector<8x384xf32>
    %36 = arith.select %27, %34, %35 : vector<8x384xi1>, vector<8x384xf32>
    %c1_13 = arith.constant 1 : index
    %c0_14 = arith.constant 0 : index
    %c0_15 = arith.constant 0 : index
    %37 = vector.load %arg6[%c1_13, %c0_14, %c0_15] : memref<8x8x384xf32, #tpu.memory_space<vmem>>, vector<1x8x384xf32>
    %38 = vector.shape_cast %37 : vector<1x8x384xf32> to vector<8x384xf32>
    %39 = vector.shape_cast %36 : vector<8x384xf32> to vector<1x8x384xf32>
    tpu.vector_store %arg6[%c1_13, %c0_14, %c0_15], %39 {strides = array<i32>} : memref<8x8x384xf32, #tpu.memory_space<vmem>>, vector<1x8x384xf32>,
    %40 = vector.extract_strided_slice %8 {offsets = [16, 0], sizes = [8, 384], strides = [1, 1]} : vector<64x384xf32> to vector<8x384xf32>
    %41 = vector.extract_strided_slice %8 {offsets = [40, 0], sizes = [8, 384], strides = [1, 1]} : vector<64x384xf32> to vector<8x384xf32>
    %42 = arith.select %27, %40, %41 : vector<8x384xi1>, vector<8x384xf32>
    %c2 = arith.constant 2 : index
    %c0_16 = arith.constant 0 : index
    %c0_17 = arith.constant 0 : index
    %43 = vector.load %arg6[%c2, %c0_16, %c0_17] : memref<8x8x384xf32, #tpu.memory_space<vmem>>, vector<1x8x384xf32>
    %44 = vector.shape_cast %43 : vector<1x8x384xf32> to vector<8x384xf32>
    %45 = vector.shape_cast %42 : vector<8x384xf32> to vector<1x8x384xf32>
    tpu.vector_store %arg6[%c2, %c0_16, %c0_17], %45 {strides = array<i32>} : memref<8x8x384xf32, #tpu.memory_space<vmem>>, vector<1x8x384xf32>,
    %46 = vector.extract_strided_slice %8 {offsets = [24, 0], sizes = [8, 384], strides = [1, 1]} : vector<64x384xf32> to vector<8x384xf32>
    %47 = vector.extract_strided_slice %8 {offsets = [32, 0], sizes = [8, 384], strides = [1, 1]} : vector<64x384xf32> to vector<8x384xf32>
    %48 = arith.select %27, %46, %47 : vector<8x384xi1>, vector<8x384xf32>
    %c3 = arith.constant 3 : index
    %c0_18 = arith.constant 0 : index
    %c0_19 = arith.constant 0 : index
    %49 = vector.load %arg6[%c3, %c0_18, %c0_19] : memref<8x8x384xf32, #tpu.memory_space<vmem>>, vector<1x8x384xf32>
    %50 = vector.shape_cast %49 : vector<1x8x384xf32> to vector<8x384xf32>
    %51 = vector.shape_cast %48 : vector<8x384xf32> to vector<1x8x384xf32>
    tpu.vector_store %arg6[%c3, %c0_18, %c0_19], %51 {strides = array<i32>} : memref<8x8x384xf32, #tpu.memory_space<vmem>>, vector<1x8x384xf32>,
    %52 = vector.extract_strided_slice %8 {offsets = [32, 0], sizes = [8, 384], strides = [1, 1]} : vector<64x384xf32> to vector<8x384xf32>
    %53 = vector.extract_strided_slice %8 {offsets = [24, 0], sizes = [8, 384], strides = [1, 1]} : vector<64x384xf32> to vector<8x384xf32>
    %54 = arith.select %27, %52, %53 : vector<8x384xi1>, vector<8x384xf32>
    %c4 = arith.constant 4 : index
    %c0_20 = arith.constant 0 : index
    %c0_21 = arith.constant 0 : index
    %55 = vector.load %arg6[%c4, %c0_20, %c0_21] : memref<8x8x384xf32, #tpu.memory_space<vmem>>, vector<1x8x384xf32>
    %56 = vector.shape_cast %55 : vector<1x8x384xf32> to vector<8x384xf32>
    %57 = vector.shape_cast %54 : vector<8x384xf32> to vector<1x8x384xf32>
    tpu.vector_store %arg6[%c4, %c0_20, %c0_21], %57 {strides = array<i32>} : memref<8x8x384xf32, #tpu.memory_space<vmem>>, vector<1x8x384xf32>,
    %58 = vector.extract_strided_slice %8 {offsets = [40, 0], sizes = [8, 384], strides = [1, 1]} : vector<64x384xf32> to vector<8x384xf32>
    %59 = vector.extract_strided_slice %8 {offsets = [16, 0], sizes = [8, 384], strides = [1, 1]} : vector<64x384xf32> to vector<8x384xf32>
    %60 = arith.select %27, %58, %59 : vector<8x384xi1>, vector<8x384xf32>
    %c5 = arith.constant 5 : index
    %c0_22 = arith.constant 0 : index
    %c0_23 = arith.constant 0 : index
    %61 = vector.load %arg6[%c5, %c0_22, %c0_23] : memref<8x8x384xf32, #tpu.memory_space<vmem>>, vector<1x8x384xf32>
    %62 = vector.shape_cast %61 : vector<1x8x384xf32> to vector<8x384xf32>
    %63 = vector.shape_cast %60 : vector<8x384xf32> to vector<1x8x384xf32>
    tpu.vector_store %arg6[%c5, %c0_22, %c0_23], %63 {strides = array<i32>} : memref<8x8x384xf32, #tpu.memory_space<vmem>>, vector<1x8x384xf32>,
    %64 = vector.extract_strided_slice %8 {offsets = [48, 0], sizes = [8, 384], strides = [1, 1]} : vector<64x384xf32> to vector<8x384xf32>
    %65 = vector.extract_strided_slice %8 {offsets = [8, 0], sizes = [8, 384], strides = [1, 1]} : vector<64x384xf32> to vector<8x384xf32>
    %66 = arith.select %27, %64, %65 : vector<8x384xi1>, vector<8x384xf32>
    %c6 = arith.constant 6 : index
    %c0_24 = arith.constant 0 : index
    %c0_25 = arith.constant 0 : index
    %67 = vector.load %arg6[%c6, %c0_24, %c0_25] : memref<8x8x384xf32, #tpu.memory_space<vmem>>, vector<1x8x384xf32>
    %68 = vector.shape_cast %67 : vector<1x8x384xf32> to vector<8x384xf32>
    %69 = vector.shape_cast %66 : vector<8x384xf32> to vector<1x8x384xf32>
    tpu.vector_store %arg6[%c6, %c0_24, %c0_25], %69 {strides = array<i32>} : memref<8x8x384xf32, #tpu.memory_space<vmem>>, vector<1x8x384xf32>,
    %70 = vector.extract_strided_slice %8 {offsets = [56, 0], sizes = [8, 384], strides = [1, 1]} : vector<64x384xf32> to vector<8x384xf32>
    %71 = vector.extract_strided_slice %8 {offsets = [0, 0], sizes = [8, 384], strides = [1, 1]} : vector<64x384xf32> to vector<8x384xf32>
    %72 = arith.select %27, %70, %71 : vector<8x384xi1>, vector<8x384xf32>
    %c7 = arith.constant 7 : index
    %c0_26 = arith.constant 0 : index
    %c0_27 = arith.constant 0 : index
    %73 = vector.load %arg6[%c7, %c0_26, %c0_27] : memref<8x8x384xf32, #tpu.memory_space<vmem>>, vector<1x8x384xf32>
    %74 = vector.shape_cast %73 : vector<1x8x384xf32> to vector<8x384xf32>
    %75 = vector.shape_cast %72 : vector<8x384xf32> to vector<1x8x384xf32>
    tpu.vector_store %arg6[%c7, %c0_26, %c0_27], %75 {strides = array<i32>} : memref<8x8x384xf32, #tpu.memory_space<vmem>>, vector<1x8x384xf32>,
    %cst_28 = arith.constant 0.000000e+00 : f32
    %76 = vector.broadcast %cst_28 : f32 to vector<8x128xf32>
    %c0_i32_29 = arith.constant 0 : i32
    %77 = arith.index_cast %c0_i32_29 : i32 to index
    %c0_30 = arith.constant 0 : index
    %c0_31 = arith.constant 0 : index
    %78 = vector.load %arg6[%77, %c0_30, %c0_31] : memref<8x8x384xf32, #tpu.memory_space<vmem>>, vector<1x8x384xf32>
    %79 = vector.shape_cast %78 : vector<1x8x384xf32> to vector<8x384xf32>
    %80 = arith.truncf %76 : vector<8x128xf32> to vector<8x128xbf16>
    %cst_32 = arith.constant dense<0.000000e+00> : vector<8x384xf32>
    %81 = tpu.matmul %80, %1, %cst_32 {dimension_numbers = #tpu.dot_dimension_numbers<[1], [0], [0], [1], [0, 0, 1, 1], [], []>} : vector<8x128xbf16>, vector<128x384xbf16>, vector<8x384xf32> -> vector<8x384xf32>
    %82 = vector.extract_strided_slice %79 {offsets = [0, 0], sizes = [8, 256], strides = [1, 1]} : vector<8x384xf32> to vector<8x256xf32>
    %83 = vector.extract_strided_slice %81 {offsets = [0, 0], sizes = [8, 256], strides = [1, 1]} : vector<8x384xf32> to vector<8x256xf32>
    %84 = arith.addf %82, %83 : vector<8x256xf32>
    %85 = arith.negf %84 : vector<8x256xf32>
    %86 = math.exp %85 : vector<8x256xf32>
    %cst_33 = arith.constant 1.000000e+00 : f32
    %87 = vector.broadcast %cst_33 : f32 to vector<8x256xf32>
    %88 = arith.addf %87, %86 : vector<8x256xf32>
    %89 = arith.divf %87, %88 : vector<8x256xf32>
    %90 = vector.extract_strided_slice %89 {offsets = [0, 0], sizes = [8, 128], strides = [1, 1]} : vector<8x256xf32> to vector<8x128xf32>
    %91 = vector.extract_strided_slice %89 {offsets = [0, 128], sizes = [8, 128], strides = [1, 1]} : vector<8x256xf32> to vector<8x128xf32>
    %92 = vector.extract_strided_slice %79 {offsets = [0, 256], sizes = [8, 128], strides = [1, 1]} : vector<8x384xf32> to vector<8x128xf32>
    %93 = vector.extract_strided_slice %81 {offsets = [0, 256], sizes = [8, 128], strides = [1, 1]} : vector<8x384xf32> to vector<8x128xf32>
    %94 = vector.broadcast %3 : vector<1x128xf32> to vector<8x128xf32>
    %95 = arith.addf %93, %94 : vector<8x128xf32>
    %96 = arith.mulf %90, %95 : vector<8x128xf32>
    %97 = arith.addf %92, %96 : vector<8x128xf32>
    %98 = math.tanh %97 : vector<8x128xf32>
    %cst_34 = arith.constant 1.000000e+00 : f32
    %99 = vector.broadcast %cst_34 : f32 to vector<8x128xf32>
    %100 = arith.subf %99, %91 : vector<8x128xf32>
    %101 = arith.mulf %100, %98 : vector<8x128xf32>
    %102 = arith.mulf %91, %76 : vector<8x128xf32>
    %103 = arith.addf %101, %102 : vector<8x128xf32>
    %c1_i32_35 = arith.constant 1 : i32
    %104 = arith.index_cast %c1_i32_35 : i32 to index
    %c0_36 = arith.constant 0 : index
    %c0_37 = arith.constant 0 : index
    %105 = vector.load %arg6[%104, %c0_36, %c0_37] : memref<8x8x384xf32, #tpu.memory_space<vmem>>, vector<1x8x384xf32>
    %106 = vector.shape_cast %105 : vector<1x8x384xf32> to vector<8x384xf32>
    %107 = arith.truncf %103 : vector<8x128xf32> to vector<8x128xbf16>
    %cst_38 = arith.constant dense<0.000000e+00> : vector<8x384xf32>
    %108 = tpu.matmul %107, %1, %cst_38 {dimension_numbers = #tpu.dot_dimension_numbers<[1], [0], [0], [1], [0, 0, 1, 1], [], []>} : vector<8x128xbf16>, vector<128x384xbf16>, vector<8x384xf32> -> vector<8x384xf32>
    %109 = vector.extract_strided_slice %106 {offsets = [0, 0], sizes = [8, 256], strides = [1, 1]} : vector<8x384xf32> to vector<8x256xf32>
    %110 = vector.extract_strided_slice %108 {offsets = [0, 0], sizes = [8, 256], strides = [1, 1]} : vector<8x384xf32> to vector<8x256xf32>
    %111 = arith.addf %109, %110 : vector<8x256xf32>
    %112 = arith.negf %111 : vector<8x256xf32>
    %113 = math.exp %112 : vector<8x256xf32>
    %cst_39 = arith.constant 1.000000e+00 : f32
    %114 = vector.broadcast %cst_39 : f32 to vector<8x256xf32>
    %115 = arith.addf %114, %113 : vector<8x256xf32>
    %116 = arith.divf %114, %115 : vector<8x256xf32>
    %117 = vector.extract_strided_slice %116 {offsets = [0, 0], sizes = [8, 128], strides = [1, 1]} : vector<8x256xf32> to vector<8x128xf32>
    %118 = vector.extract_strided_slice %116 {offsets = [0, 128], sizes = [8, 128], strides = [1, 1]} : vector<8x256xf32> to vector<8x128xf32>
    %119 = vector.extract_strided_slice %106 {offsets = [0, 256], sizes = [8, 128], strides = [1, 1]} : vector<8x384xf32> to vector<8x128xf32>
    %120 = vector.extract_strided_slice %108 {offsets = [0, 256], sizes = [8, 128], strides = [1, 1]} : vector<8x384xf32> to vector<8x128xf32>
    %121 = vector.broadcast %3 : vector<1x128xf32> to vector<8x128xf32>
    %122 = arith.addf %120, %121 : vector<8x128xf32>
    %123 = arith.mulf %117, %122 : vector<8x128xf32>
    %124 = arith.addf %119, %123 : vector<8x128xf32>
    %125 = math.tanh %124 : vector<8x128xf32>
    %cst_40 = arith.constant 1.000000e+00 : f32
    %126 = vector.broadcast %cst_40 : f32 to vector<8x128xf32>
    %127 = arith.subf %126, %118 : vector<8x128xf32>
    %128 = arith.mulf %127, %125 : vector<8x128xf32>
    %129 = arith.mulf %118, %103 : vector<8x128xf32>
    %130 = arith.addf %128, %129 : vector<8x128xf32>
    %c2_i32 = arith.constant 2 : i32
    %131 = arith.index_cast %c2_i32 : i32 to index
    %c0_41 = arith.constant 0 : index
    %c0_42 = arith.constant 0 : index
    %132 = vector.load %arg6[%131, %c0_41, %c0_42] : memref<8x8x384xf32, #tpu.memory_space<vmem>>, vector<1x8x384xf32>
    %133 = vector.shape_cast %132 : vector<1x8x384xf32> to vector<8x384xf32>
    %134 = arith.truncf %130 : vector<8x128xf32> to vector<8x128xbf16>
    %cst_43 = arith.constant dense<0.000000e+00> : vector<8x384xf32>
    %135 = tpu.matmul %134, %1, %cst_43 {dimension_numbers = #tpu.dot_dimension_numbers<[1], [0], [0], [1], [0, 0, 1, 1], [], []>} : vector<8x128xbf16>, vector<128x384xbf16>, vector<8x384xf32> -> vector<8x384xf32>
    %136 = vector.extract_strided_slice %133 {offsets = [0, 0], sizes = [8, 256], strides = [1, 1]} : vector<8x384xf32> to vector<8x256xf32>
    %137 = vector.extract_strided_slice %135 {offsets = [0, 0], sizes = [8, 256], strides = [1, 1]} : vector<8x384xf32> to vector<8x256xf32>
    %138 = arith.addf %136, %137 : vector<8x256xf32>
    %139 = arith.negf %138 : vector<8x256xf32>
    %140 = math.exp %139 : vector<8x256xf32>
    %cst_44 = arith.constant 1.000000e+00 : f32
    %141 = vector.broadcast %cst_44 : f32 to vector<8x256xf32>
    %142 = arith.addf %141, %140 : vector<8x256xf32>
    %143 = arith.divf %141, %142 : vector<8x256xf32>
    %144 = vector.extract_strided_slice %143 {offsets = [0, 0], sizes = [8, 128], strides = [1, 1]} : vector<8x256xf32> to vector<8x128xf32>
    %145 = vector.extract_strided_slice %143 {offsets = [0, 128], sizes = [8, 128], strides = [1, 1]} : vector<8x256xf32> to vector<8x128xf32>
    %146 = vector.extract_strided_slice %133 {offsets = [0, 256], sizes = [8, 128], strides = [1, 1]} : vector<8x384xf32> to vector<8x128xf32>
    %147 = vector.extract_strided_slice %135 {offsets = [0, 256], sizes = [8, 128], strides = [1, 1]} : vector<8x384xf32> to vector<8x128xf32>
    %148 = vector.broadcast %3 : vector<1x128xf32> to vector<8x128xf32>
    %149 = arith.addf %147, %148 : vector<8x128xf32>
    %150 = arith.mulf %144, %149 : vector<8x128xf32>
    %151 = arith.addf %146, %150 : vector<8x128xf32>
    %152 = math.tanh %151 : vector<8x128xf32>
    %cst_45 = arith.constant 1.000000e+00 : f32
    %153 = vector.broadcast %cst_45 : f32 to vector<8x128xf32>
    %154 = arith.subf %153, %145 : vector<8x128xf32>
    %155 = arith.mulf %154, %152 : vector<8x128xf32>
    %156 = arith.mulf %145, %130 : vector<8x128xf32>
    %157 = arith.addf %155, %156 : vector<8x128xf32>
    %c3_i32 = arith.constant 3 : i32
    %158 = arith.index_cast %c3_i32 : i32 to index
    %c0_46 = arith.constant 0 : index
    %c0_47 = arith.constant 0 : index
    %159 = vector.load %arg6[%158, %c0_46, %c0_47] : memref<8x8x384xf32, #tpu.memory_space<vmem>>, vector<1x8x384xf32>
    %160 = vector.shape_cast %159 : vector<1x8x384xf32> to vector<8x384xf32>
    %161 = arith.truncf %157 : vector<8x128xf32> to vector<8x128xbf16>
    %cst_48 = arith.constant dense<0.000000e+00> : vector<8x384xf32>
    %162 = tpu.matmul %161, %1, %cst_48 {dimension_numbers = #tpu.dot_dimension_numbers<[1], [0], [0], [1], [0, 0, 1, 1], [], []>} : vector<8x128xbf16>, vector<128x384xbf16>, vector<8x384xf32> -> vector<8x384xf32>
    %163 = vector.extract_strided_slice %160 {offsets = [0, 0], sizes = [8, 256], strides = [1, 1]} : vector<8x384xf32> to vector<8x256xf32>
    %164 = vector.extract_strided_slice %162 {offsets = [0, 0], sizes = [8, 256], strides = [1, 1]} : vector<8x384xf32> to vector<8x256xf32>
    %165 = arith.addf %163, %164 : vector<8x256xf32>
    %166 = arith.negf %165 : vector<8x256xf32>
    %167 = math.exp %166 : vector<8x256xf32>
    %cst_49 = arith.constant 1.000000e+00 : f32
    %168 = vector.broadcast %cst_49 : f32 to vector<8x256xf32>
    %169 = arith.addf %168, %167 : vector<8x256xf32>
    %170 = arith.divf %168, %169 : vector<8x256xf32>
    %171 = vector.extract_strided_slice %170 {offsets = [0, 0], sizes = [8, 128], strides = [1, 1]} : vector<8x256xf32> to vector<8x128xf32>
    %172 = vector.extract_strided_slice %170 {offsets = [0, 128], sizes = [8, 128], strides = [1, 1]} : vector<8x256xf32> to vector<8x128xf32>
    %173 = vector.extract_strided_slice %160 {offsets = [0, 256], sizes = [8, 128], strides = [1, 1]} : vector<8x384xf32> to vector<8x128xf32>
    %174 = vector.extract_strided_slice %162 {offsets = [0, 256], sizes = [8, 128], strides = [1, 1]} : vector<8x384xf32> to vector<8x128xf32>
    %175 = vector.broadcast %3 : vector<1x128xf32> to vector<8x128xf32>
    %176 = arith.addf %174, %175 : vector<8x128xf32>
    %177 = arith.mulf %171, %176 : vector<8x128xf32>
    %178 = arith.addf %173, %177 : vector<8x128xf32>
    %179 = math.tanh %178 : vector<8x128xf32>
    %cst_50 = arith.constant 1.000000e+00 : f32
    %180 = vector.broadcast %cst_50 : f32 to vector<8x128xf32>
    %181 = arith.subf %180, %172 : vector<8x128xf32>
    %182 = arith.mulf %181, %179 : vector<8x128xf32>
    %183 = arith.mulf %172, %157 : vector<8x128xf32>
    %184 = arith.addf %182, %183 : vector<8x128xf32>
    %c4_i32 = arith.constant 4 : i32
    %185 = arith.index_cast %c4_i32 : i32 to index
    %c0_51 = arith.constant 0 : index
    %c0_52 = arith.constant 0 : index
    %186 = vector.load %arg6[%185, %c0_51, %c0_52] : memref<8x8x384xf32, #tpu.memory_space<vmem>>, vector<1x8x384xf32>
    %187 = vector.shape_cast %186 : vector<1x8x384xf32> to vector<8x384xf32>
    %188 = arith.truncf %184 : vector<8x128xf32> to vector<8x128xbf16>
    %cst_53 = arith.constant dense<0.000000e+00> : vector<8x384xf32>
    %189 = tpu.matmul %188, %1, %cst_53 {dimension_numbers = #tpu.dot_dimension_numbers<[1], [0], [0], [1], [0, 0, 1, 1], [], []>} : vector<8x128xbf16>, vector<128x384xbf16>, vector<8x384xf32> -> vector<8x384xf32>
    %190 = vector.extract_strided_slice %187 {offsets = [0, 0], sizes = [8, 256], strides = [1, 1]} : vector<8x384xf32> to vector<8x256xf32>
    %191 = vector.extract_strided_slice %189 {offsets = [0, 0], sizes = [8, 256], strides = [1, 1]} : vector<8x384xf32> to vector<8x256xf32>
    %192 = arith.addf %190, %191 : vector<8x256xf32>
    %193 = arith.negf %192 : vector<8x256xf32>
    %194 = math.exp %193 : vector<8x256xf32>
    %cst_54 = arith.constant 1.000000e+00 : f32
    %195 = vector.broadcast %cst_54 : f32 to vector<8x256xf32>
    %196 = arith.addf %195, %194 : vector<8x256xf32>
    %197 = arith.divf %195, %196 : vector<8x256xf32>
    %198 = vector.extract_strided_slice %197 {offsets = [0, 0], sizes = [8, 128], strides = [1, 1]} : vector<8x256xf32> to vector<8x128xf32>
    %199 = vector.extract_strided_slice %197 {offsets = [0, 128], sizes = [8, 128], strides = [1, 1]} : vector<8x256xf32> to vector<8x128xf32>
    %200 = vector.extract_strided_slice %187 {offsets = [0, 256], sizes = [8, 128], strides = [1, 1]} : vector<8x384xf32> to vector<8x128xf32>
    %201 = vector.extract_strided_slice %189 {offsets = [0, 256], sizes = [8, 128], strides = [1, 1]} : vector<8x384xf32> to vector<8x128xf32>
    %202 = vector.broadcast %3 : vector<1x128xf32> to vector<8x128xf32>
    %203 = arith.addf %201, %202 : vector<8x128xf32>
    %204 = arith.mulf %198, %203 : vector<8x128xf32>
    %205 = arith.addf %200, %204 : vector<8x128xf32>
    %206 = math.tanh %205 : vector<8x128xf32>
    %cst_55 = arith.constant 1.000000e+00 : f32
    %207 = vector.broadcast %cst_55 : f32 to vector<8x128xf32>
    %208 = arith.subf %207, %199 : vector<8x128xf32>
    %209 = arith.mulf %208, %206 : vector<8x128xf32>
    %210 = arith.mulf %199, %184 : vector<8x128xf32>
    %211 = arith.addf %209, %210 : vector<8x128xf32>
    %c5_i32 = arith.constant 5 : i32
    %212 = arith.index_cast %c5_i32 : i32 to index
    %c0_56 = arith.constant 0 : index
    %c0_57 = arith.constant 0 : index
    %213 = vector.load %arg6[%212, %c0_56, %c0_57] : memref<8x8x384xf32, #tpu.memory_space<vmem>>, vector<1x8x384xf32>
    %214 = vector.shape_cast %213 : vector<1x8x384xf32> to vector<8x384xf32>
    %215 = arith.truncf %211 : vector<8x128xf32> to vector<8x128xbf16>
    %cst_58 = arith.constant dense<0.000000e+00> : vector<8x384xf32>
    %216 = tpu.matmul %215, %1, %cst_58 {dimension_numbers = #tpu.dot_dimension_numbers<[1], [0], [0], [1], [0, 0, 1, 1], [], []>} : vector<8x128xbf16>, vector<128x384xbf16>, vector<8x384xf32> -> vector<8x384xf32>
    %217 = vector.extract_strided_slice %214 {offsets = [0, 0], sizes = [8, 256], strides = [1, 1]} : vector<8x384xf32> to vector<8x256xf32>
    %218 = vector.extract_strided_slice %216 {offsets = [0, 0], sizes = [8, 256], strides = [1, 1]} : vector<8x384xf32> to vector<8x256xf32>
    %219 = arith.addf %217, %218 : vector<8x256xf32>
    %220 = arith.negf %219 : vector<8x256xf32>
    %221 = math.exp %220 : vector<8x256xf32>
    %cst_59 = arith.constant 1.000000e+00 : f32
    %222 = vector.broadcast %cst_59 : f32 to vector<8x256xf32>
    %223 = arith.addf %222, %221 : vector<8x256xf32>
    %224 = arith.divf %222, %223 : vector<8x256xf32>
    %225 = vector.extract_strided_slice %224 {offsets = [0, 0], sizes = [8, 128], strides = [1, 1]} : vector<8x256xf32> to vector<8x128xf32>
    %226 = vector.extract_strided_slice %224 {offsets = [0, 128], sizes = [8, 128], strides = [1, 1]} : vector<8x256xf32> to vector<8x128xf32>
    %227 = vector.extract_strided_slice %214 {offsets = [0, 256], sizes = [8, 128], strides = [1, 1]} : vector<8x384xf32> to vector<8x128xf32>
    %228 = vector.extract_strided_slice %216 {offsets = [0, 256], sizes = [8, 128], strides = [1, 1]} : vector<8x384xf32> to vector<8x128xf32>
    %229 = vector.broadcast %3 : vector<1x128xf32> to vector<8x128xf32>
    %230 = arith.addf %228, %229 : vector<8x128xf32>
    %231 = arith.mulf %225, %230 : vector<8x128xf32>
    %232 = arith.addf %227, %231 : vector<8x128xf32>
    %233 = math.tanh %232 : vector<8x128xf32>
    %cst_60 = arith.constant 1.000000e+00 : f32
    %234 = vector.broadcast %cst_60 : f32 to vector<8x128xf32>
    %235 = arith.subf %234, %226 : vector<8x128xf32>
    %236 = arith.mulf %235, %233 : vector<8x128xf32>
    %237 = arith.mulf %226, %211 : vector<8x128xf32>
    %238 = arith.addf %236, %237 : vector<8x128xf32>
    %c6_i32 = arith.constant 6 : i32
    %239 = arith.index_cast %c6_i32 : i32 to index
    %c0_61 = arith.constant 0 : index
    %c0_62 = arith.constant 0 : index
    %240 = vector.load %arg6[%239, %c0_61, %c0_62] : memref<8x8x384xf32, #tpu.memory_space<vmem>>, vector<1x8x384xf32>
    %241 = vector.shape_cast %240 : vector<1x8x384xf32> to vector<8x384xf32>
    %242 = arith.truncf %238 : vector<8x128xf32> to vector<8x128xbf16>
    %cst_63 = arith.constant dense<0.000000e+00> : vector<8x384xf32>
    %243 = tpu.matmul %242, %1, %cst_63 {dimension_numbers = #tpu.dot_dimension_numbers<[1], [0], [0], [1], [0, 0, 1, 1], [], []>} : vector<8x128xbf16>, vector<128x384xbf16>, vector<8x384xf32> -> vector<8x384xf32>
    %244 = vector.extract_strided_slice %241 {offsets = [0, 0], sizes = [8, 256], strides = [1, 1]} : vector<8x384xf32> to vector<8x256xf32>
    %245 = vector.extract_strided_slice %243 {offsets = [0, 0], sizes = [8, 256], strides = [1, 1]} : vector<8x384xf32> to vector<8x256xf32>
    %246 = arith.addf %244, %245 : vector<8x256xf32>
    %247 = arith.negf %246 : vector<8x256xf32>
    %248 = math.exp %247 : vector<8x256xf32>
    %cst_64 = arith.constant 1.000000e+00 : f32
    %249 = vector.broadcast %cst_64 : f32 to vector<8x256xf32>
    %250 = arith.addf %249, %248 : vector<8x256xf32>
    %251 = arith.divf %249, %250 : vector<8x256xf32>
    %252 = vector.extract_strided_slice %251 {offsets = [0, 0], sizes = [8, 128], strides = [1, 1]} : vector<8x256xf32> to vector<8x128xf32>
    %253 = vector.extract_strided_slice %251 {offsets = [0, 128], sizes = [8, 128], strides = [1, 1]} : vector<8x256xf32> to vector<8x128xf32>
    %254 = vector.extract_strided_slice %241 {offsets = [0, 256], sizes = [8, 128], strides = [1, 1]} : vector<8x384xf32> to vector<8x128xf32>
    %255 = vector.extract_strided_slice %243 {offsets = [0, 256], sizes = [8, 128], strides = [1, 1]} : vector<8x384xf32> to vector<8x128xf32>
    %256 = vector.broadcast %3 : vector<1x128xf32> to vector<8x128xf32>
    %257 = arith.addf %255, %256 : vector<8x128xf32>
    %258 = arith.mulf %252, %257 : vector<8x128xf32>
    %259 = arith.addf %254, %258 : vector<8x128xf32>
    %260 = math.tanh %259 : vector<8x128xf32>
    %cst_65 = arith.constant 1.000000e+00 : f32
    %261 = vector.broadcast %cst_65 : f32 to vector<8x128xf32>
    %262 = arith.subf %261, %253 : vector<8x128xf32>
    %263 = arith.mulf %262, %260 : vector<8x128xf32>
    %264 = arith.mulf %253, %238 : vector<8x128xf32>
    %265 = arith.addf %263, %264 : vector<8x128xf32>
    %c7_i32 = arith.constant 7 : i32
    %266 = arith.index_cast %c7_i32 : i32 to index
    %c0_66 = arith.constant 0 : index
    %c0_67 = arith.constant 0 : index
    %267 = vector.load %arg6[%266, %c0_66, %c0_67] : memref<8x8x384xf32, #tpu.memory_space<vmem>>, vector<1x8x384xf32>
    %268 = vector.shape_cast %267 : vector<1x8x384xf32> to vector<8x384xf32>
    %269 = arith.truncf %265 : vector<8x128xf32> to vector<8x128xbf16>
    %cst_68 = arith.constant dense<0.000000e+00> : vector<8x384xf32>
    %270 = tpu.matmul %269, %1, %cst_68 {dimension_numbers = #tpu.dot_dimension_numbers<[1], [0], [0], [1], [0, 0, 1, 1], [], []>} : vector<8x128xbf16>, vector<128x384xbf16>, vector<8x384xf32> -> vector<8x384xf32>
    %271 = vector.extract_strided_slice %268 {offsets = [0, 0], sizes = [8, 256], strides = [1, 1]} : vector<8x384xf32> to vector<8x256xf32>
    %272 = vector.extract_strided_slice %270 {offsets = [0, 0], sizes = [8, 256], strides = [1, 1]} : vector<8x384xf32> to vector<8x256xf32>
    %273 = arith.addf %271, %272 : vector<8x256xf32>
    %274 = arith.negf %273 : vector<8x256xf32>
    %275 = math.exp %274 : vector<8x256xf32>
    %cst_69 = arith.constant 1.000000e+00 : f32
    %276 = vector.broadcast %cst_69 : f32 to vector<8x256xf32>
    %277 = arith.addf %276, %275 : vector<8x256xf32>
    %278 = arith.divf %276, %277 : vector<8x256xf32>
    %279 = vector.extract_strided_slice %278 {offsets = [0, 0], sizes = [8, 128], strides = [1, 1]} : vector<8x256xf32> to vector<8x128xf32>
    %280 = vector.extract_strided_slice %278 {offsets = [0, 128], sizes = [8, 128], strides = [1, 1]} : vector<8x256xf32> to vector<8x128xf32>
    %281 = vector.extract_strided_slice %268 {offsets = [0, 256], sizes = [8, 128], strides = [1, 1]} : vector<8x384xf32> to vector<8x128xf32>
    %282 = vector.extract_strided_slice %270 {offsets = [0, 256], sizes = [8, 128], strides = [1, 1]} : vector<8x384xf32> to vector<8x128xf32>
    %283 = vector.broadcast %3 : vector<1x128xf32> to vector<8x128xf32>
    %284 = arith.addf %282, %283 : vector<8x128xf32>
    %285 = arith.mulf %279, %284 : vector<8x128xf32>
    %286 = arith.addf %281, %285 : vector<8x128xf32>
    %287 = math.tanh %286 : vector<8x128xf32>
    %cst_70 = arith.constant 1.000000e+00 : f32
    %288 = vector.broadcast %cst_70 : f32 to vector<8x128xf32>
    %289 = arith.subf %288, %280 : vector<8x128xf32>
    %290 = arith.mulf %289, %287 : vector<8x128xf32>
    %291 = arith.mulf %280, %265 : vector<8x128xf32>
    %292 = arith.addf %290, %291 : vector<8x128xf32>
    %c8_i32 = arith.constant 8 : i32
    %c0_71 = arith.constant 0 : index
    %c0_72 = arith.constant 0 : index
    %293 = vector.load %arg3[%c0_71, %c0_72] : memref<128x32xf32, #tpu.memory_space<vmem>>, vector<128x32xf32>
    %cst_73 = arith.constant dense<0.000000e+00> : vector<8x32xf32>
    %294 = tpu.matmul %292, %293, %cst_73 {dimension_numbers = #tpu.dot_dimension_numbers<[1], [0], [0], [1], [0, 0, 1, 1], [], []>} : vector<8x128xf32>, vector<128x32xf32>, vector<8x32xf32> -> vector<8x32xf32>
    %c0_74 = arith.constant 0 : index
    %c0_75 = arith.constant 0 : index
    %295 = vector.load %arg4[%c0_74, %c0_75] : memref<3x32xf32, #tpu.memory_space<vmem>>, vector<1x32xf32>
    %296 = vector.broadcast %295 : vector<1x32xf32> to vector<8x32xf32>
    %297 = arith.addf %294, %296 : vector<8x32xf32>
    %cst_76 = arith.constant 0.000000e+00 : f32
    %298 = vector.broadcast %cst_76 : f32 to vector<8x32xf32>
    %299 = arith.maximumf %297, %298 : vector<8x32xf32>
    %c1_77 = arith.constant 1 : index
    %c0_78 = arith.constant 0 : index
    %300 = vector.load %arg4[%c1_77, %c0_78] : memref<3x32xf32, #tpu.memory_space<vmem>>, vector<1x32xf32>
    %301 = vector.broadcast %300 : vector<1x32xf32> to vector<8x32xf32>
    %302 = arith.mulf %299, %301 : vector<8x32xf32>
    %cst_79 = arith.constant dense<0.000000e+00> : vector<8xf32>
    %303 = vector.multi_reduction <add>, %302, %cst_79 [1] : vector<8x32xf32> to vector<8xf32>
    %304 = vector.shape_cast %303 : vector<8xf32> to vector<8x1xf32>
    %c2_80 = arith.constant 2 : index
    %c0_81 = arith.constant 0 : index
    %305 = vector.load %arg4[%c2_80, %c0_81] : memref<3x32xf32, #tpu.memory_space<vmem>>, vector<1x1xf32>
    %306 = vector.broadcast %305 : vector<1x1xf32> to vector<8x1xf32>
    %307 = arith.addf %304, %306 : vector<8x1xf32>
    %c0_82 = arith.constant 0 : index
    %c0_83 = arith.constant 0 : index
    %308 = vector.load %arg5[%c0_82, %c0_83] : memref<8x1xf32, #tpu.memory_space<vmem>>, vector<8x1xf32>
    tpu.vector_store %arg5[%c0_82, %c0_83], %307 {strides = array<i32>} : memref<8x1xf32, #tpu.memory_space<vmem>>, vector<8x1xf32>,
    return
  }
}

</mosaic_0001>

<llo_original>
// kernel: tpu_custom_call.1
$region0: #{tpu_custom_call.1}
  #allocation0 [shape = 'u32[]', space=smem, size = 0x4, offset = 0x4, fixed_abs, tag = 'smem constant byte address 0x4 - core index']
  #allocation1 [shape = 'u32[72,128]{1,0:T(1,128)}', space=vmem, size = 0x9000, scoped, tag = 'internal scratch']
  #allocation2 [shape = 'f32[8,8,384]{2,1,0:T(8,128)}', space=vmem, size = 0x18000, scoped, tag = 'scratch operand']
  %s0 = inlined_call_operand.vmem [shape: f32[64,32], index: 0, kind: input, shape index: {}]
  %s1 = inlined_call_operand.hbm [shape: bf16[160,384], index: 1, kind: input, shape index: {}]
  %s2 = inlined_call_operand.vmem [shape: f32[2,384], index: 2, kind: input, shape index: {}]
  %s3 = inlined_call_operand.vmem [shape: f32[128,32], index: 3, kind: input, shape index: {}]
  %s4 = inlined_call_operand.vmem [shape: f32[3,32], index: 4, kind: input, shape index: {}]
  %s5 = inlined_call_operand.vmem [shape: f32[8,1], index: 5, kind: output, shape index: {}]
  %s6 = sld [smem:[#allocation0]]
  $region34: #{tpu_custom_call.1} parent=0
    _
  %s8 = ssub.s32 1, %s6
  %s9 = scalar_select 0, %s8, %s6
  $region1: #{tpu_custom_call.1} parent=0
    #allocation3 [shape = 'u8[122880]{0}', space=vmem, size = 0x1e000, scoped, tag = 'input window, operand 1, single buffered']
    #allocation4 [shape = 's32[1]{0}', space=sflag, size = 0x4, scoped, tag = 'scoped memory for tpu_custom_call.1']
    %10 = vsyncpa [#allocation4], 0
    // Predicated region
    $region2: #{tpu_custom_call.1} parent=1 // pred_check
      _
    $region3: #{tpu_custom_call.1} parent=1 // pred_check_branch
      %12 = sbr.rel (0) target = $region5
    $region4: #{tpu_custom_call.1} parent=1 // pred_region
      _
    $region5: #{tpu_custom_call.1} parent=1 // pred_fallthru
      _
    // Predicated region
    $region6: #{tpu_custom_call.1} parent=1 // pred_check
      _
    $region7: #{tpu_custom_call.1} parent=1 // pred_check_branch
      %14 = sbr.rel (0) target = $region9
    $region8: #{tpu_custom_call.1} parent=1 // pred_region
      %16 = vsyncadd [#allocation4], 0
      %s17 = sshll.u32 %s1, 4
      %s18 = int_to_ptr.hbm [resolvable:$true] %s17
      %s19 = sshll.u32 [#allocation3], 4
      %s20 = int_to_ptr.vmem [resolvable:$true] %s19
      %25 = dma.hbm_to_vmem [thread:$0]  %s18, 3840, %s20, [#allocation4], 192, 192, 12
    $region9: #{tpu_custom_call.1} parent=1 // pred_fallthru
      _
    // Predicated region
    $region10: #{tpu_custom_call.1} parent=1 // pred_check
      _
    $region11: #{tpu_custom_call.1} parent=1 // pred_check_branch
      %27 = sbr.rel (0) target = $region13
    $region12: #{tpu_custom_call.1} parent=1 // pred_region
      _
    $region13: #{tpu_custom_call.1} parent=1 // pred_fallthru
      _
    // Predicated region
    $region14: #{tpu_custom_call.1} parent=1 // pred_check
      _
    $region15: #{tpu_custom_call.1} parent=1 // pred_check_branch
      %29 = sbr.rel (0) target = $region17
    $region16: #{tpu_custom_call.1} parent=1 // pred_region
      _
    $region17: #{tpu_custom_call.1} parent=1 // pred_fallthru
      _
    // Predicated region
    $region18: #{tpu_custom_call.1} parent=1 // pred_check
      _
    $region19: #{tpu_custom_call.1} parent=1 // pred_check_branch
      %31 = sbr.rel (0) target = $region21
    $region20: #{tpu_custom_call.1} parent=1 // pred_region
      _
    $region21: #{tpu_custom_call.1} parent=1 // pred_fallthru
      _
    // Predicated region
    $region22: #{tpu_custom_call.1} parent=1 // pred_check
      _
    $region23: #{tpu_custom_call.1} parent=1 // pred_check_branch
      %33 = sbr.rel (0) target = $region25
    $region24: #{tpu_custom_call.1} parent=1 // pred_region
      %35 = dma.done [#allocation4], 3840
    $region25: #{tpu_custom_call.1} parent=1 // pred_fallthru
      _
    %v37 = vld [vmem:[#allocation3] sm:$0xff]
    %v38 = vld [vmem:[#allocation3 + $0x8] sm:$0xf]
    %v39 = vld [vmem:[#allocation3 + $0xc] sm:$0xff]
    %v40 = vld [vmem:[#allocation3 + $0x14] sm:$0xf]
    %v41 = vld [vmem:[#allocation3 + $0x18] sm:$0xff]
    %v42 = vld [vmem:[#allocation3 + $0x20] sm:$0xf]
    %v43 = vld [vmem:[#allocation3 + $0x24] sm:$0xff]
    %v44 = vld [vmem:[#allocation3 + $0x2c] sm:$0xf]
    %v45 = vld [vmem:[#allocation3 + $0x30] sm:$0xff]
    %v46 = vld [vmem:[#allocation3 + $0x38] sm:$0xf]
    %v47 = vld [vmem:[#allocation3 + $0x3c] sm:$0xff]
    %v48 = vld [vmem:[#allocation3 + $0x44] sm:$0xf]
    %v49 = vld [vmem:[#allocation3 + $0x48] sm:$0xff]
    %v50 = vld [vmem:[#allocation3 + $0x50] sm:$0xf]
    %v51 = vld [vmem:[#allocation3 + $0x54] sm:$0xff]
    %v52 = vld [vmem:[#allocation3 + $0x5c] sm:$0xf]
    %v53 = vld [vmem:[#allocation3 + $0x60] sm:$0xff]
    %v54 = vld [vmem:[#allocation3 + $0x68] sm:$0xf]
    %v55 = vld [vmem:[#allocation3 + $0x6c] sm:$0xff]
    %v56 = vld [vmem:[#allocation3 + $0x74] sm:$0xf]
    %v57 = vld [vmem:[#allocation3 + $0x78] sm:$0xff]
    %v58 = vld [vmem:[#allocation3 + $0x80] sm:$0xf]
    %v59 = vld [vmem:[#allocation3 + $0x84] sm:$0xff]
    %v60 = vld [vmem:[#allocation3 + $0x8c] sm:$0xf]
    %v61 = vld [vmem:[#allocation3 + $0x90] sm:$0xff]
    %v62 = vld [vmem:[#allocation3 + $0x98] sm:$0xf]
    %v63 = vld [vmem:[#allocation3 + $0x9c] sm:$0xff]
    %v64 = vld [vmem:[#allocation3 + $0xa4] sm:$0xf]
    %v65 = vld [vmem:[#allocation3 + $0xa8] sm:$0xff]
    %v66 = vld [vmem:[#allocation3 + $0xb0] sm:$0xf]
    %v67 = vld [vmem:[#allocation3 + $0xb4] sm:$0xff]
    %v68 = vld [vmem:[#allocation3 + $0xbc] sm:$0xf]
    %v69 = vld [vmem:[#allocation3 + $0xc0] sm:$0xff]
    %v70 = vld [vmem:[#allocation3 + $0xc8] sm:$0xf]
    %v71 = vld [vmem:[#allocation3 + $0xcc] sm:$0xff]
    %v72 = vld [vmem:[#allocation3 + $0xd4] sm:$0xf]
    %v73 = vld [vmem:[#allocation3 + $0xd8] sm:$0xff]
    %v74 = vld [vmem:[#allocation3 + $0xe0] sm:$0xf]
    %v75 = vld [vmem:[#allocation3 + $0xe4] sm:$0xff]
    %v76 = vld [vmem:[#allocation3 + $0xec] sm:$0xf]
    %v77 = vld [vmem:[%s2] ss:$2 sm:$0x7]
    %v78 = vld [vmem:[%s2 + $0x1] sm:$0x1]
    %v79 = vld [vmem:[%s0] sm:$0xff]
    %v80 = vld [vmem:[%s0 + $0x8] sm:$0xff]
    %v81 = vld [vmem:[%s0 + $0x10] sm:$0xff]
    %v82 = vld [vmem:[%s0 + $0x18] sm:$0xff]
    %v83 = vld [vmem:[%s0 + $0x20] sm:$0xff]
    %v84 = vld [vmem:[%s0 + $0x28] sm:$0xff]
    %v85 = vld [vmem:[%s0 + $0x30] sm:$0xff]
    %v86 = vld [vmem:[%s0 + $0x38] sm:$0xff]
    %v87 = vpack.c.bf16 %v80, %v79
    %v88 = vpack.c.bf16 %v82, %v81
    %v89 = vpack.c.bf16 %v84, %v83
    %v90 = vpack.c.bf16 %v86, %v85
    %v92 = vperm.slane %v77, 0
    %v93 = vperm.slane %v77, 1
    %v94 = vperm.slane %v77, 2
    %v106 = vunpack.c.l.b16 %v37
    %v107 = vunpack.c.h.b16 %v37
    %v108 = vunpack.c.l.b16 %v38
    %v109 = vunpack.c.l.b16 %v39
    %v110 = vunpack.c.h.b16 %v39
    %v111 = vunpack.c.l.b16 %v40
    %v112 = vunpack.c.l.b16 %v41
    %v113 = vunpack.c.h.b16 %v41
    %v114 = vunpack.c.l.b16 %v42
    %v115 = vunpack.c.l.b16 %v43
    %v116 = vunpack.c.h.b16 %v43
    %v117 = vunpack.c.l.b16 %v44
    %v118 = vpack.c.b16 %v109, %v106
    %v119 = vpack.c.b16 %v110, %v107
    %v120 = vpack.c.b16 %v111, %v108
    %v121 = vpack.c.b16 %v115, %v112
    %v122 = vpack.c.b16 %v116, %v113
    %v123 = vpack.c.b16 %v117, %v114
    %vm130 = vcmask 261120
    %v132 = vsel %vm130, %v87, 0
    %v135 = vsel %vm130, %v88, 0
    %v138 = vsel %vm130, %v89, 0
    %v141 = vsel %vm130, %v90, 0
    %143 = vmatpush.bf16.msra.mxu0 0
    %144 = vmatpush.bf16.msra.mxu0 0
    %145 = vmatpush.bf16.msra.mxu0 0
    %146 = vmatpush.bf16.msra.mxu0 0
    %147 = vmatpush.bf16.msra.mxu0 0
    %148 = vmatpush.bf16.msra.mxu0 0
    %149 = vmatpush.bf16.msra.mxu0 %v121
    %150 = vmatpush.bf16.msra.mxu0 %v118
    %151 = vmatmul.bf16.gmra.mxu0 %v132
    %v152 = vpop.f32.mrf.mxu0
    %v153 = vadd.f32 %v92, %v152
    %v154 = vpop.f32.mrf.mxu0
    %v155 = vadd.f32 %v92, %v154
    %156 = vmatmul.bf16.gmra.mxu0 %v135
    %v157 = vpop.f32.mrf.mxu0
    %v158 = vadd.f32 %v92, %v157
    %v159 = vpop.f32.mrf.mxu0
    %v160 = vadd.f32 %v92, %v159
    %161 = vmatmul.bf16.gmra.mxu0 %v138
    %v162 = vpop.f32.mrf.mxu0
    %v163 = vadd.f32 %v92, %v162
    %v164 = vpop.f32.mrf.mxu0
    %v165 = vadd.f32 %v92, %v164
    %166 = vmatmul.bf16.gmra.mxu0 %v141
    %v167 = vpop.f32.mrf.mxu0
    %v168 = vadd.f32 %v92, %v167
    %v169 = vpop.f32.mrf.mxu0
    %v170 = vadd.f32 %v92, %v169
    %171 = vdwg.mxu0
    %172 = vmatpush.bf16.msra.mxu0 0
    %173 = vmatpush.bf16.msra.mxu0 0
    %174 = vmatpush.bf16.msra.mxu0 0
    %175 = vmatpush.bf16.msra.mxu0 0
    %176 = vmatpush.bf16.msra.mxu0 0
    %177 = vmatpush.bf16.msra.mxu0 0
    %178 = vmatpush.bf16.msra.mxu0 %v122
    %179 = vmatpush.bf16.msra.mxu0 %v119
    %180 = vmatmul.bf16.gmra.mxu0 %v132
    %v181 = vpop.f32.mrf.mxu0
    %v182 = vadd.f32 %v93, %v181
    %v183 = vpop.f32.mrf.mxu0
    %v184 = vadd.f32 %v93, %v183
    %185 = vmatmul.bf16.gmra.mxu0 %v135
    %v186 = vpop.f32.mrf.mxu0
    %v187 = vadd.f32 %v93, %v186
    %v188 = vpop.f32.mrf.mxu0
    %v189 = vadd.f32 %v93, %v188
    %190 = vmatmul.bf16.gmra.mxu0 %v138
    %v191 = vpop.f32.mrf.mxu0
    %v192 = vadd.f32 %v93, %v191
    %v193 = vpop.f32.mrf.mxu0
    %v194 = vadd.f32 %v93, %v193
    %195 = vmatmul.bf16.gmra.mxu0 %v141
    %v196 = vpop.f32.mrf.mxu0
    %v197 = vadd.f32 %v93, %v196
    %v198 = vpop.f32.mrf.mxu0
    %v199 = vadd.f32 %v93, %v198
    %200 = vdwg.mxu0
    %201 = vmatpush.bf16.msra.mxu0 0
    %202 = vmatpush.bf16.msra.mxu0 0
    %203 = vmatpush.bf16.msra.mxu0 0
    %204 = vmatpush.bf16.msra.mxu0 0
    %205 = vmatpush.bf16.msra.mxu0 0
    %206 = vmatpush.bf16.msra.mxu0 0
    %207 = vmatpush.bf16.msra.mxu0 %v123
    %208 = vmatpush.bf16.msra.mxu0 %v120
    %209 = vmatmul.bf16.gmra.mxu0 %v132
    %v210 = vpop.f32.mrf.mxu0
    %v211 = vadd.f32 %v94, %v210
    %v212 = vpop.f32.mrf.mxu0
    %v213 = vadd.f32 %v94, %v212
    %214 = vmatmul.bf16.gmra.mxu0 %v135
    %v215 = vpop.f32.mrf.mxu0
    %v216 = vadd.f32 %v94, %v215
    %v217 = vpop.f32.mrf.mxu0
    %v218 = vadd.f32 %v94, %v217
    %219 = vmatmul.bf16.gmra.mxu0 %v138
    %v220 = vpop.f32.mrf.mxu0
    %v221 = vadd.f32 %v94, %v220
    %v222 = vpop.f32.mrf.mxu0
    %v223 = vadd.f32 %v94, %v222
    %224 = vmatmul.bf16.gmra.mxu0 %v141
    %v225 = vpop.f32.mrf.mxu0
    %v226 = vadd.f32 %v94, %v225
    %v227 = vpop.f32.mrf.mxu0
    %v228 = vadd.f32 %v94, %v227
    %229 = vdwg.mxu0
    %v230 = vlaneseq
    %v231 = vand.u32 %v230, 127
    %v232 = vadd.s32 %v231, 128
    %v233 = vadd.s32 %v231, 256
    %vm234 = vcmp.lt.s32.totalorder %v231, 0
    %v235 = vsub.s32 0, %v231
    %v236 = vsel %vm234, %v235, %v231
    %v237 = vshrl.u32 %v236, 7
    %v238 = vand.u32 %v236, 127
    %v239 = vsub.s32 0, %v238
    %v240 = vsel %vm234, %v239, %v238
    %vm241 = vcmp.lt.s32.totalorder %v232, 0
    %v242 = vsub.s32 0, %v232
    %v243 = vsel %vm241, %v242, %v232
    %v244 = vshrl.u32 %v243, 7
    %v245 = vand.u32 %v243, 127
    %v246 = vsub.s32 0, %v245
    %v247 = vsel %vm241, %v246, %v245
    %vm248 = vcmp.lt.s32.totalorder %v233, 0
    %v249 = vsub.s32 0, %v233
    %v250 = vsel %vm248, %v249, %v233
    %v251 = vshrl.u32 %v250, 7
    %v252 = vand.u32 %v250, 127
    %v253 = vsub.s32 0, %v252
    %v254 = vsel %vm248, %v253, %v252
    %vm255 = vcmp.ne.s32.totalorder %v240, 0
    %vm256 = vcmp.ne.s32.totalorder %v247, 0
    %vm257 = vcmp.ne.s32.totalorder %v254, 0
    %vm258 = vcmp.lt.s32.totalorder %v240, 0
    %vm259 = vcmp.lt.s32.totalorder %v247, 0
    %vm260 = vcmp.lt.s32.totalorder %v254, 0
    %vm261 = vmand %vm258, %vm255
    %vm262 = vmand %vm259, %vm256
    %vm263 = vmand %vm260, %vm257
    %v264 = vadd.s32 %v240, 128
    %v265 = vadd.s32 %v247, 128
    %v266 = vadd.s32 %v254, 128
    %v267 = vsel %vm261, %v264, %v240
    %v268 = vsel %vm262, %v265, %v247
    %v269 = vsel %vm263, %v266, %v254
    %vm270 = vcmp.lt.s32.totalorder %v267, 32
    %vm271 = vcmp.lt.s32.totalorder %v268, 32
    %vm272 = vcmp.lt.s32.totalorder %v269, 32
    %v273 = vsel %vm270, %v153, %v170
    %v274 = vsel %vm271, %v182, %v199
    %v275 = vsel %vm272, %v211, %v228
    %276 = vst [vmem:[#allocation2] sm:$0xff] %v273
    %277 = vst [vmem:[#allocation2 + $0x8] sm:$0xff] %v274
    %278 = vst [vmem:[#allocation2 + $0x10] sm:$0xff] %v275
    %v279 = vsel %vm270, %v155, %v168
    %v280 = vsel %vm271, %v184, %v197
    %v281 = vsel %vm272, %v213, %v226
    %s282 = scalar_lea.vmem [#allocation2], 24
    %283 = vst [vmem:[%s282] sm:$0xff] %v279
    %284 = vst [vmem:[%s282 + $0x8] sm:$0xff] %v280
    %285 = vst [vmem:[%s282 + $0x10] sm:$0xff] %v281
    %v286 = vsel %vm270, %v158, %v165
    %v287 = vsel %vm271, %v187, %v194
    %v288 = vsel %vm272, %v216, %v223
    %s289 = scalar_lea.vmem [#allocation2], 48
    %290 = vst [vmem:[%s289] sm:$0xff] %v286
    %291 = vst [vmem:[%s289 + $0x8] sm:$0xff] %v287
    %292 = vst [vmem:[%s289 + $0x10] sm:$0xff] %v288
    %v293 = vsel %vm270, %v160, %v163
    %v294 = vsel %vm271, %v189, %v192
    %v295 = vsel %vm272, %v218, %v221
    %s296 = scalar_lea.vmem [#allocation2], 72
    %297 = vst [vmem:[%s296] sm:$0xff] %v293
    %298 = vst [vmem:[%s296 + $0x8] sm:$0xff] %v294
    %299 = vst [vmem:[%s296 + $0x10] sm:$0xff] %v295
    %v300 = vsel %vm270, %v163, %v160
    %v301 = vsel %vm271, %v192, %v189
    %v302 = vsel %vm272, %v221, %v218
    %s303 = scalar_lea.vmem [#allocation2], 96
    %304 = vst [vmem:[%s303] sm:$0xff] %v300
    %305 = vst [vmem:[%s303 + $0x8] sm:$0xff] %v301
    %306 = vst [vmem:[%s303 + $0x10] sm:$0xff] %v302
    %v307 = vsel %vm270, %v165, %v158
    %v308 = vsel %vm271, %v194, %v187
    %v309 = vsel %vm272, %v223, %v216
    %s310 = scalar_lea.vmem [#allocation2], 120
    %311 = vst [vmem:[%s310] sm:$0xff] %v307
    %312 = vst [vmem:[%s310 + $0x8] sm:$0xff] %v308
    %313 = vst [vmem:[%s310 + $0x10] sm:$0xff] %v309
    %v314 = vsel %vm270, %v168, %v155
    %v315 = vsel %vm271, %v197, %v184
    %v316 = vsel %vm272, %v226, %v213
    %s317 = scalar_lea.vmem [#allocation2], 144
    %318 = vst [vmem:[%s317] sm:$0xff] %v314
    %319 = vst [vmem:[%s317 + $0x8] sm:$0xff] %v315
    %320 = vst [vmem:[%s317 + $0x10] sm:$0xff] %v316
    %v321 = vsel %vm270, %v170, %v153
    %v322 = vsel %vm271, %v199, %v182
    %v323 = vsel %vm272, %v228, %v211
    %s324 = scalar_lea.vmem [#allocation2], 168
    %325 = vst [vmem:[%s324] sm:$0xff] %v321
    %326 = vst [vmem:[%s324 + $0x8] sm:$0xff] %v322
    %327 = vst [vmem:[%s324 + $0x10] sm:$0xff] %v323
    %v328 = vld [vmem:[#allocation2] sm:$0xff]
    %v329 = vld [vmem:[#allocation2 + $0x8] sm:$0xff]
    %v330 = vld [vmem:[#allocation2 + $0x10] sm:$0xff]
    %v363 = vunpack.c.l.b16 %v45
    %v364 = vunpack.c.h.b16 %v45
    %v365 = vunpack.c.l.b16 %v46
    %v366 = vunpack.c.l.b16 %v47
    %v367 = vunpack.c.h.b16 %v47
    %v368 = vunpack.c.l.b16 %v48
    %v369 = vunpack.c.l.b16 %v49
    %v370 = vunpack.c.h.b16 %v49
    %v371 = vunpack.c.l.b16 %v50
    %v372 = vunpack.c.l.b16 %v51
    %v373 = vunpack.c.h.b16 %v51
    %v374 = vunpack.c.l.b16 %v52
    %v375 = vunpack.c.l.b16 %v53
    %v376 = vunpack.c.h.b16 %v53
    %v377 = vunpack.c.l.b16 %v54
    %v378 = vunpack.c.l.b16 %v55
    %v379 = vunpack.c.h.b16 %v55
    %v380 = vunpack.c.l.b16 %v56
    %v381 = vunpack.c.l.b16 %v57
    %v382 = vunpack.c.h.b16 %v57
    %v383 = vunpack.c.l.b16 %v58
    %v384 = vunpack.c.l.b16 %v59
    %v385 = vunpack.c.h.b16 %v59
    %v386 = vunpack.c.l.b16 %v60
    %v387 = vunpack.c.l.b16 %v61
    %v388 = vunpack.c.h.b16 %v61
    %v389 = vunpack.c.l.b16 %v62
    %v390 = vunpack.c.l.b16 %v63
    %v391 = vunpack.c.h.b16 %v63
    %v392 = vunpack.c.l.b16 %v64
    %v393 = vunpack.c.l.b16 %v65
    %v394 = vunpack.c.h.b16 %v65
    %v395 = vunpack.c.l.b16 %v66
    %v396 = vunpack.c.l.b16 %v67
    %v397 = vunpack.c.h.b16 %v67
    %v398 = vunpack.c.l.b16 %v68
    %v399 = vunpack.c.l.b16 %v69
    %v400 = vunpack.c.h.b16 %v69
    %v401 = vunpack.c.l.b16 %v70
    %v402 = vunpack.c.l.b16 %v71
    %v403 = vunpack.c.h.b16 %v71
    %v404 = vunpack.c.l.b16 %v72
    %v405 = vunpack.c.l.b16 %v73
    %v406 = vunpack.c.h.b16 %v73
    %v407 = vunpack.c.l.b16 %v74
    %v408 = vunpack.c.l.b16 %v75
    %v409 = vunpack.c.h.b16 %v75
    %v410 = vunpack.c.l.b16 %v76
    %v411 = vpack.c.b16 %v366, %v363
    %v412 = vpack.c.b16 %v367, %v364
    %v413 = vpack.c.b16 %v368, %v365
    %v414 = vpack.c.b16 %v372, %v369
    %v415 = vpack.c.b16 %v373, %v370
    %v416 = vpack.c.b16 %v374, %v371
    %v417 = vpack.c.b16 %v378, %v375
    %v418 = vpack.c.b16 %v379, %v376
    %v419 = vpack.c.b16 %v380, %v377
    %v420 = vpack.c.b16 %v384, %v381
    %v421 = vpack.c.b16 %v385, %v382
    %v422 = vpack.c.b16 %v386, %v383
    %v423 = vpack.c.b16 %v390, %v387
    %v424 = vpack.c.b16 %v391, %v388
    %v425 = vpack.c.b16 %v392, %v389
    %v426 = vpack.c.b16 %v396, %v393
    %v427 = vpack.c.b16 %v397, %v394
    %v428 = vpack.c.b16 %v398, %v395
    %v429 = vpack.c.b16 %v402, %v399
    %v430 = vpack.c.b16 %v403, %v400
    %v431 = vpack.c.b16 %v404, %v401
    %v432 = vpack.c.b16 %v408, %v405
    %v433 = vpack.c.b16 %v409, %v406
    %v434 = vpack.c.b16 %v410, %v407
    %459 = vmatpush.bf16.msra.mxu0 %v432
    %460 = vmatpush.bf16.msra.mxu0 %v429
    %461 = vmatpush.bf16.msra.mxu0 %v426
    %462 = vmatpush.bf16.msra.mxu0 %v423
    %463 = vmatpush.bf16.msra.mxu0 %v420
    %464 = vmatpush.bf16.msra.mxu0 %v417
    %465 = vmatpush.bf16.msra.mxu0 %v414
    %466 = vmatpush.bf16.msra.mxu0 %v411
    %467 = vmatmul.bf16.gmra.mxu0 0
    %v468 = vpop.f32.mrf.mxu0
    %v469 = vadd.f32 0.0, %v468
    %v470 = vpop.f32.mrf.mxu0
    %471 = vdwg.mxu0
    %472 = vmatpush.bf16.msra.mxu0 %v433
    %473 = vmatpush.bf16.msra.mxu0 %v430
    %474 = vmatpush.bf16.msra.mxu0 %v427
    %475 = vmatpush.bf16.msra.mxu0 %v424
    %476 = vmatpush.bf16.msra.mxu0 %v421
    %477 = vmatpush.bf16.msra.mxu0 %v418
    %478 = vmatpush.bf16.msra.mxu0 %v415
    %479 = vmatpush.bf16.msra.mxu0 %v412
    %480 = vmatmul.bf16.gmra.mxu0 0
    %v481 = vpop.f32.mrf.mxu0
    %v482 = vadd.f32 0.0, %v481
    %v483 = vpop.f32.mrf.mxu0
    %484 = vdwg.mxu0
    %485 = vmatpush.bf16.msra.mxu0 %v434
    %486 = vmatpush.bf16.msra.mxu0 %v431
    %487 = vmatpush.bf16.msra.mxu0 %v428
    %488 = vmatpush.bf16.msra.mxu0 %v425
    %489 = vmatpush.bf16.msra.mxu0 %v422
    %490 = vmatpush.bf16.msra.mxu0 %v419
    %491 = vmatpush.bf16.msra.mxu0 %v416
    %492 = vmatpush.bf16.msra.mxu0 %v413
    %493 = vmatmul.bf16.gmra.mxu0 0
    %v494 = vpop.f32.mrf.mxu0
    %v495 = vadd.f32 0.0, %v494
    %v496 = vpop.f32.mrf.mxu0
    %497 = vdwg.mxu0
    %v498 = vadd.f32 %v328, %v469
    %v499 = vadd.f32 %v329, %v482
    %v500 = vxor.u32 %v498, 2147483648
    %v501 = vxor.u32 %v499, 2147483648
    %v502 = vmul.f32 %v500, 1.442695
    %v503 = vpow.pop %v502
    %v504 = vmul.f32 %v501, 1.442695
    %v505 = vpow.pop %v504
    %v506 = vadd.f32 %v503, 1.0
    %v507 = vadd.f32 %v505, 1.0
    %v508 = vrcp.pop %v506
    %v509 = vmul.f32 %v506, %v508
    %v510 = vsub.f32 1.0, %v509
    %v511 = vmul.f32 %v508, %v510
    %v512 = vadd.f32 %v508, %v511
    %vm513 = vweird.f32 %v506
    %vm514 = vweird.f32 %v508
    %vm515 = vmor %vm513, %vm514
    %v516 = vsel %vm515, %v508, %v512
    %v517 = vand.u32 2147483647, %v506
    %vm518 = vcmp.eq.f32.partialorder %v517, 8.507059e+37
    %v519 = vand.u32 %v506, 2147483648
    %v520 = vor.u32 1.1754944e-38, %v519
    %v521 = vsel %vm518, %v520, %v516
    %v522 = vmul.f32 1.0, %v521
    %v523 = vrcp.pop %v507
    %v524 = vmul.f32 %v507, %v523
    %v525 = vsub.f32 1.0, %v524
    %v526 = vmul.f32 %v523, %v525
    %v527 = vadd.f32 %v523, %v526
    %vm528 = vweird.f32 %v507
    %vm529 = vweird.f32 %v523
    %vm530 = vmor %vm528, %vm529
    %v531 = vsel %vm530, %v523, %v527
    %v532 = vand.u32 2147483647, %v507
    %vm533 = vcmp.eq.f32.partialorder %v532, 8.507059e+37
    %v534 = vand.u32 %v507, 2147483648
    %v535 = vor.u32 1.1754944e-38, %v534
    %v536 = vsel %vm533, %v535, %v531
    %v537 = vmul.f32 1.0, %v536
    %v538 = vperm.slane %v78, 0
    %v539 = vadd.f32 %v495, %v538
    %v540 = vmul.f32 %v522, %v539
    %v541 = vadd.f32 %v330, %v540
    %v542 = vtanh.pop %v541
    %v543 = vsub.f32 1.0, %v537
    %v544 = vmul.f32 %v543, %v542
    %v545 = vmul.f32 %v537, 0.0
    %v546 = vadd.f32 %v544, %v545
    %v547 = vld [vmem:[%s282] sm:$0xff]
    %v548 = vld [vmem:[%s282 + $0x8] sm:$0xff]
    %v549 = vld [vmem:[%s282 + $0x10] sm:$0xff]
    %v550 = vpack.c.bf16 %v546, %v546
    %551 = vmatpush.bf16.msra.mxu0 %v432
    %552 = vmatpush.bf16.msra.mxu0 %v429
    %553 = vmatpush.bf16.msra.mxu0 %v426
    %554 = vmatpush.bf16.msra.mxu0 %v423
    %555 = vmatpush.bf16.msra.mxu0 %v420
    %556 = vmatpush.bf16.msra.mxu0 %v417
    %557 = vmatpush.bf16.msra.mxu0 %v414
    %558 = vmatpush.bf16.msra.mxu0 %v411
    %559 = vmatmul.bf16.gmra.mxu0 %v550
    %v560 = vpop.f32.mrf.mxu0
    %v561 = vadd.f32 0.0, %v560
    %v562 = vpop.f32.mrf.mxu0
    %563 = vdwg.mxu0
    %564 = vmatpush.bf16.msra.mxu0 %v433
    %565 = vmatpush.bf16.msra.mxu0 %v430
    %566 = vmatpush.bf16.msra.mxu0 %v427
    %567 = vmatpush.bf16.msra.mxu0 %v424
    %568 = vmatpush.bf16.msra.mxu0 %v421
    %569 = vmatpush.bf16.msra.mxu0 %v418
    %570 = vmatpush.bf16.msra.mxu0 %v415
    %571 = vmatpush.bf16.msra.mxu0 %v412
    %572 = vmatmul.bf16.gmra.mxu0 %v550
    %v573 = vpop.f32.mrf.mxu0
    %v574 = vadd.f32 0.0, %v573
    %v575 = vpop.f32.mrf.mxu0
    %576 = vdwg.mxu0
    %577 = vmatpush.bf16.msra.mxu0 %v434
    %578 = vmatpush.bf16.msra.mxu0 %v431
    %579 = vmatpush.bf16.msra.mxu0 %v428
    %580 = vmatpush.bf16.msra.mxu0 %v425
    %581 = vmatpush.bf16.msra.mxu0 %v422
    %582 = vmatpush.bf16.msra.mxu0 %v419
    %583 = vmatpush.bf16.msra.mxu0 %v416
    %584 = vmatpush.bf16.msra.mxu0 %v413
    %585 = vmatmul.bf16.gmra.mxu0 %v550
    %v586 = vpop.f32.mrf.mxu0
    %v587 = vadd.f32 0.0, %v586
    %v588 = vpop.f32.mrf.mxu0
    %589 = vdwg.mxu0
    %v590 = vadd.f32 %v547, %v561
    %v591 = vadd.f32 %v548, %v574
    %v592 = vxor.u32 %v590, 2147483648
    %v593 = vxor.u32 %v591, 2147483648
    %v594 = vmul.f32 %v592, 1.442695
    %v595 = vpow.pop %v594
    %v596 = vmul.f32 %v593, 1.442695
    %v597 = vpow.pop %v596
    %v598 = vadd.f32 %v595, 1.0
    %v599 = vadd.f32 %v597, 1.0
    %v600 = vrcp.pop %v598
    %v601 = vmul.f32 %v598, %v600
    %v602 = vsub.f32 1.0, %v601
    %v603 = vmul.f32 %v600, %v602
    %v604 = vadd.f32 %v600, %v603
    %vm605 = vweird.f32 %v598
    %vm606 = vweird.f32 %v600
    %vm607 = vmor %vm605, %vm606
    %v608 = vsel %vm607, %v600, %v604
    %v609 = vand.u32 2147483647, %v598
    %vm610 = vcmp.eq.f32.partialorder %v609, 8.507059e+37
    %v611 = vand.u32 %v598, 2147483648
    %v612 = vor.u32 1.1754944e-38, %v611
    %v613 = vsel %vm610, %v612, %v608
    %v614 = vmul.f32 1.0, %v613
    %v615 = vrcp.pop %v599
    %v616 = vmul.f32 %v599, %v615
    %v617 = vsub.f32 1.0, %v616
    %v618 = vmul.f32 %v615, %v617
    %v619 = vadd.f32 %v615, %v618
    %vm620 = vweird.f32 %v599
    %vm621 = vweird.f32 %v615
    %vm622 = vmor %vm620, %vm621
    %v623 = vsel %vm622, %v615, %v619
    %v624 = vand.u32 2147483647, %v599
    %vm625 = vcmp.eq.f32.partialorder %v624, 8.507059e+37
    %v626 = vand.u32 %v599, 2147483648
    %v627 = vor.u32 1.1754944e-38, %v626
    %v628 = vsel %vm625, %v627, %v623
    %v629 = vmul.f32 1.0, %v628
    %v630 = vadd.f32 %v587, %v538
    %v631 = vmul.f32 %v614, %v630
    %v632 = vadd.f32 %v549, %v631
    %v633 = vtanh.pop %v632
    %v634 = vsub.f32 1.0, %v629
    %v635 = vmul.f32 %v634, %v633
    %v636 = vmul.f32 %v629, %v546
    %v637 = vadd.f32 %v635, %v636
    %v638 = vld [vmem:[%s289] sm:$0xff]
    %v639 = vld [vmem:[%s289 + $0x8] sm:$0xff]
    %v640 = vld [vmem:[%s289 + $0x10] sm:$0xff]
    %v641 = vpack.c.bf16 %v637, %v637
    %642 = vmatpush.bf16.msra.mxu0 %v432
    %643 = vmatpush.bf16.msra.mxu0 %v429
    %644 = vmatpush.bf16.msra.mxu0 %v426
    %645 = vmatpush.bf16.msra.mxu0 %v423
    %646 = vmatpush.bf16.msra.mxu0 %v420
    %647 = vmatpush.bf16.msra.mxu0 %v417
    %648 = vmatpush.bf16.msra.mxu0 %v414
    %649 = vmatpush.bf16.msra.mxu0 %v411
    %650 = vmatmul.bf16.gmra.mxu0 %v641
    %v651 = vpop.f32.mrf.mxu0
    %v652 = vadd.f32 0.0, %v651
    %v653 = vpop.f32.mrf.mxu0
    %654 = vdwg.mxu0
    %655 = vmatpush.bf16.msra.mxu0 %v433
    %656 = vmatpush.bf16.msra.mxu0 %v430
    %657 = vmatpush.bf16.msra.mxu0 %v427
    %658 = vmatpush.bf16.msra.mxu0 %v424
    %659 = vmatpush.bf16.msra.mxu0 %v421
    %660 = vmatpush.bf16.msra.mxu0 %v418
    %661 = vmatpush.bf16.msra.mxu0 %v415
    %662 = vmatpush.bf16.msra.mxu0 %v412
    %663 = vmatmul.bf16.gmra.mxu0 %v641
    %v664 = vpop.f32.mrf.mxu0
    %v665 = vadd.f32 0.0, %v664
    %v666 = vpop.f32.mrf.mxu0
    %667 = vdwg.mxu0
    %668 = vmatpush.bf16.msra.mxu0 %v434
    %669 = vmatpush.bf16.msra.mxu0 %v431
    %670 = vmatpush.bf16.msra.mxu0 %v428
    %671 = vmatpush.bf16.msra.mxu0 %v425
    %672 = vmatpush.bf16.msra.mxu0 %v422
    %673 = vmatpush.bf16.msra.mxu0 %v419
    %674 = vmatpush.bf16.msra.mxu0 %v416
    %675 = vmatpush.bf16.msra.mxu0 %v413
    %676 = vmatmul.bf16.gmra.mxu0 %v641
    %v677 = vpop.f32.mrf.mxu0
    %v678 = vadd.f32 0.0, %v677
    %v679 = vpop.f32.mrf.mxu0
    %680 = vdwg.mxu0
    %v681 = vadd.f32 %v638, %v652
    %v682 = vadd.f32 %v639, %v665
    %v683 = vxor.u32 %v681, 2147483648
    %v684 = vxor.u32 %v682, 2147483648
    %v685 = vmul.f32 %v683, 1.442695
    %v686 = vpow.pop %v685
    %v687 = vmul.f32 %v684, 1.442695
    %v688 = vpow.pop %v687
    %v689 = vadd.f32 %v686, 1.0
    %v690 = vadd.f32 %v688, 1.0
    %v691 = vrcp.pop %v689
    %v692 = vmul.f32 %v689, %v691
    %v693 = vsub.f32 1.0, %v692
    %v694 = vmul.f32 %v691, %v693
    %v695 = vadd.f32 %v691, %v694
    %vm696 = vweird.f32 %v689
    %vm697 = vweird.f32 %v691
    %vm698 = vmor %vm696, %vm697
    %v699 = vsel %vm698, %v691, %v695
    %v700 = vand.u32 2147483647, %v689
    %vm701 = vcmp.eq.f32.partialorder %v700, 8.507059e+37
    %v702 = vand.u32 %v689, 2147483648
    %v703 = vor.u32 1.1754944e-38, %v702
    %v704 = vsel %vm701, %v703, %v699
    %v705 = vmul.f32 1.0, %v704
    %v706 = vrcp.pop %v690
    %v707 = vmul.f32 %v690, %v706
    %v708 = vsub.f32 1.0, %v707
    %v709 = vmul.f32 %v706, %v708
    %v710 = vadd.f32 %v706, %v709
    %vm711 = vweird.f32 %v690
    %vm712 = vweird.f32 %v706
    %vm713 = vmor %vm711, %vm712
    %v714 = vsel %vm713, %v706, %v710
    %v715 = vand.u32 2147483647, %v690
    %vm716 = vcmp.eq.f32.partialorder %v715, 8.507059e+37
    %v717 = vand.u32 %v690, 2147483648
    %v718 = vor.u32 1.1754944e-38, %v717
    %v719 = vsel %vm716, %v718, %v714
    %v720 = vmul.f32 1.0, %v719
    %v721 = vadd.f32 %v678, %v538
    %v722 = vmul.f32 %v705, %v721
    %v723 = vadd.f32 %v640, %v722
    %v724 = vtanh.pop %v723
    %v725 = vsub.f32 1.0, %v720
    %v726 = vmul.f32 %v725, %v724
    %v727 = vmul.f32 %v720, %v637
    %v728 = vadd.f32 %v726, %v727
    %v729 = vld [vmem:[%s296] sm:$0xff]
    %v730 = vld [vmem:[%s296 + $0x8] sm:$0xff]
    %v731 = vld [vmem:[%s296 + $0x10] sm:$0xff]
    %v732 = vpack.c.bf16 %v728, %v728
    %733 = vmatpush.bf16.msra.mxu0 %v432
    %734 = vmatpush.bf16.msra.mxu0 %v429
    %735 = vmatpush.bf16.msra.mxu0 %v426
    %736 = vmatpush.bf16.msra.mxu0 %v423
    %737 = vmatpush.bf16.msra.mxu0 %v420
    %738 = vmatpush.bf16.msra.mxu0 %v417
    %739 = vmatpush.bf16.msra.mxu0 %v414
    %740 = vmatpush.bf16.msra.mxu0 %v411
    %741 = vmatmul.bf16.gmra.mxu0 %v732
    %v742 = vpop.f32.mrf.mxu0
    %v743 = vadd.f32 0.0, %v742
    %v744 = vpop.f32.mrf.mxu0
    %745 = vdwg.mxu0
    %746 = vmatpush.bf16.msra.mxu0 %v433
    %747 = vmatpush.bf16.msra.mxu0 %v430
    %748 = vmatpush.bf16.msra.mxu0 %v427
    %749 = vmatpush.bf16.msra.mxu0 %v424
    %750 = vmatpush.bf16.msra.mxu0 %v421
    %751 = vmatpush.bf16.msra.mxu0 %v418
    %752 = vmatpush.bf16.msra.mxu0 %v415
    %753 = vmatpush.bf16.msra.mxu0 %v412
    %754 = vmatmul.bf16.gmra.mxu0 %v732
    %v755 = vpop.f32.mrf.mxu0
    %v756 = vadd.f32 0.0, %v755
    %v757 = vpop.f32.mrf.mxu0
    %758 = vdwg.mxu0
    %759 = vmatpush.bf16.msra.mxu0 %v434
    %760 = vmatpush.bf16.msra.mxu0 %v431
    %761 = vmatpush.bf16.msra.mxu0 %v428
    %762 = vmatpush.bf16.msra.mxu0 %v425
    %763 = vmatpush.bf16.msra.mxu0 %v422
    %764 = vmatpush.bf16.msra.mxu0 %v419
    %765 = vmatpush.bf16.msra.mxu0 %v416
    %766 = vmatpush.bf16.msra.mxu0 %v413
    %767 = vmatmul.bf16.gmra.mxu0 %v732
    %v768 = vpop.f32.mrf.mxu0
    %v769 = vadd.f32 0.0, %v768
    %v770 = vpop.f32.mrf.mxu0
    %771 = vdwg.mxu0
    %v772 = vadd.f32 %v729, %v743
    %v773 = vadd.f32 %v730, %v756
    %v774 = vxor.u32 %v772, 2147483648
    %v775 = vxor.u32 %v773, 2147483648
    %v776 = vmul.f32 %v774, 1.442695
    %v777 = vpow.pop %v776
    %v778 = vmul.f32 %v775, 1.442695
    %v779 = vpow.pop %v778
    %v780 = vadd.f32 %v777, 1.0
    %v781 = vadd.f32 %v779, 1.0
    %v782 = vrcp.pop %v780
    %v783 = vmul.f32 %v780, %v782
    %v784 = vsub.f32 1.0, %v783
    %v785 = vmul.f32 %v782, %v784
    %v786 = vadd.f32 %v782, %v785
    %vm787 = vweird.f32 %v780
    %vm788 = vweird.f32 %v782
    %vm789 = vmor %vm787, %vm788
    %v790 = vsel %vm789, %v782, %v786
    %v791 = vand.u32 2147483647, %v780
    %vm792 = vcmp.eq.f32.partialorder %v791, 8.507059e+37
    %v793 = vand.u32 %v780, 2147483648
    %v794 = vor.u32 1.1754944e-38, %v793
    %v795 = vsel %vm792, %v794, %v790
    %v796 = vmul.f32 1.0, %v795
    %v797 = vrcp.pop %v781
    %v798 = vmul.f32 %v781, %v797
    %v799 = vsub.f32 1.0, %v798
    %v800 = vmul.f32 %v797, %v799
    %v801 = vadd.f32 %v797, %v800
    %vm802 = vweird.f32 %v781
    %vm803 = vweird.f32 %v797
    %vm804 = vmor %vm802, %vm803
    %v805 = vsel %vm804, %v797, %v801
    %v806 = vand.u32 2147483647, %v781
    %vm807 = vcmp.eq.f32.partialorder %v806, 8.507059e+37
    %v808 = vand.u32 %v781, 2147483648
    %v809 = vor.u32 1.1754944e-38, %v808
    %v810 = vsel %vm807, %v809, %v805
    %v811 = vmul.f32 1.0, %v810
    %v812 = vadd.f32 %v769, %v538
    %v813 = vmul.f32 %v796, %v812
    %v814 = vadd.f32 %v731, %v813
    %v815 = vtanh.pop %v814
    %v816 = vsub.f32 1.0, %v811
    %v817 = vmul.f32 %v816, %v815
    %v818 = vmul.f32 %v811, %v728
    %v819 = vadd.f32 %v817, %v818
    %v820 = vld [vmem:[%s303] sm:$0xff]
    %v821 = vld [vmem:[%s303 + $0x8] sm:$0xff]
    %v822 = vld [vmem:[%s303 + $0x10] sm:$0xff]
    %v823 = vpack.c.bf16 %v819, %v819
    %824 = vmatpush.bf16.msra.mxu0 %v432
    %825 = vmatpush.bf16.msra.mxu0 %v429
    %826 = vmatpush.bf16.msra.mxu0 %v426
    %827 = vmatpush.bf16.msra.mxu0 %v423
    %828 = vmatpush.bf16.msra.mxu0 %v420
    %829 = vmatpush.bf16.msra.mxu0 %v417
    %830 = vmatpush.bf16.msra.mxu0 %v414
    %831 = vmatpush.bf16.msra.mxu0 %v411
    %832 = vmatmul.bf16.gmra.mxu0 %v823
    %v833 = vpop.f32.mrf.mxu0
    %v834 = vadd.f32 0.0, %v833
    %v835 = vpop.f32.mrf.mxu0
    %836 = vdwg.mxu0
    %837 = vmatpush.bf16.msra.mxu0 %v433
    %838 = vmatpush.bf16.msra.mxu0 %v430
    %839 = vmatpush.bf16.msra.mxu0 %v427
    %840 = vmatpush.bf16.msra.mxu0 %v424
    %841 = vmatpush.bf16.msra.mxu0 %v421
    %842 = vmatpush.bf16.msra.mxu0 %v418
    %843 = vmatpush.bf16.msra.mxu0 %v415
    %844 = vmatpush.bf16.msra.mxu0 %v412
    %845 = vmatmul.bf16.gmra.mxu0 %v823
    %v846 = vpop.f32.mrf.mxu0
    %v847 = vadd.f32 0.0, %v846
    %v848 = vpop.f32.mrf.mxu0
    %849 = vdwg.mxu0
    %850 = vmatpush.bf16.msra.mxu0 %v434
    %851 = vmatpush.bf16.msra.mxu0 %v431
    %852 = vmatpush.bf16.msra.mxu0 %v428
    %853 = vmatpush.bf16.msra.mxu0 %v425
    %854 = vmatpush.bf16.msra.mxu0 %v422
    %855 = vmatpush.bf16.msra.mxu0 %v419
    %856 = vmatpush.bf16.msra.mxu0 %v416
    %857 = vmatpush.bf16.msra.mxu0 %v413
    %858 = vmatmul.bf16.gmra.mxu0 %v823
    %v859 = vpop.f32.mrf.mxu0
    %v860 = vadd.f32 0.0, %v859
    %v861 = vpop.f32.mrf.mxu0
    %862 = vdwg.mxu0
    %v863 = vadd.f32 %v820, %v834
    %v864 = vadd.f32 %v821, %v847
    %v865 = vxor.u32 %v863, 2147483648
    %v866 = vxor.u32 %v864, 2147483648
    %v867 = vmul.f32 %v865, 1.442695
    %v868 = vpow.pop %v867
    %v869 = vmul.f32 %v866, 1.442695
    %v870 = vpow.pop %v869
    %v871 = vadd.f32 %v868, 1.0
    %v872 = vadd.f32 %v870, 1.0
    %v873 = vrcp.pop %v871
    %v874 = vmul.f32 %v871, %v873
    %v875 = vsub.f32 1.0, %v874
    %v876 = vmul.f32 %v873, %v875
    %v877 = vadd.f32 %v873, %v876
    %vm878 = vweird.f32 %v871
    %vm879 = vweird.f32 %v873
    %vm880 = vmor %vm878, %vm879
    %v881 = vsel %vm880, %v873, %v877
    %v882 = vand.u32 2147483647, %v871
    %vm883 = vcmp.eq.f32.partialorder %v882, 8.507059e+37
    %v884 = vand.u32 %v871, 2147483648
    %v885 = vor.u32 1.1754944e-38, %v884
    %v886 = vsel %vm883, %v885, %v881
    %v887 = vmul.f32 1.0, %v886
    %v888 = vrcp.pop %v872
    %v889 = vmul.f32 %v872, %v888
    %v890 = vsub.f32 1.0, %v889
    %v891 = vmul.f32 %v888, %v890
    %v892 = vadd.f32 %v888, %v891
    %vm893 = vweird.f32 %v872
    %vm894 = vweird.f32 %v888
    %vm895 = vmor %vm893, %vm894
    %v896 = vsel %vm895, %v888, %v892
    %v897 = vand.u32 2147483647, %v872
    %vm898 = vcmp.eq.f32.partialorder %v897, 8.507059e+37
    %v899 = vand.u32 %v872, 2147483648
    %v900 = vor.u32 1.1754944e-38, %v899
    %v901 = vsel %vm898, %v900, %v896
    %v902 = vmul.f32 1.0, %v901
    %v903 = vadd.f32 %v860, %v538
    %v904 = vmul.f32 %v887, %v903
    %v905 = vadd.f32 %v822, %v904
    %v906 = vtanh.pop %v905
    %v907 = vsub.f32 1.0, %v902
    %v908 = vmul.f32 %v907, %v906
    %v909 = vmul.f32 %v902, %v819
    %v910 = vadd.f32 %v908, %v909
    %v911 = vld [vmem:[%s310] sm:$0xff]
    %v912 = vld [vmem:[%s310 + $0x8] sm:$0xff]
    %v913 = vld [vmem:[%s310 + $0x10] sm:$0xff]
    %v914 = vpack.c.bf16 %v910, %v910
    %915 = vmatpush.bf16.msra.mxu0 %v432
    %916 = vmatpush.bf16.msra.mxu0 %v429
    %917 = vmatpush.bf16.msra.mxu0 %v426
    %918 = vmatpush.bf16.msra.mxu0 %v423
    %919 = vmatpush.bf16.msra.mxu0 %v420
    %920 = vmatpush.bf16.msra.mxu0 %v417
    %921 = vmatpush.bf16.msra.mxu0 %v414
    %922 = vmatpush.bf16.msra.mxu0 %v411
    %923 = vmatmul.bf16.gmra.mxu0 %v914
    %v924 = vpop.f32.mrf.mxu0
    %v925 = vadd.f32 0.0, %v924
    %v926 = vpop.f32.mrf.mxu0
    %927 = vdwg.mxu0
    %928 = vmatpush.bf16.msra.mxu0 %v433
    %929 = vmatpush.bf16.msra.mxu0 %v430
    %930 = vmatpush.bf16.msra.mxu0 %v427
    %931 = vmatpush.bf16.msra.mxu0 %v424
    %932 = vmatpush.bf16.msra.mxu0 %v421
    %933 = vmatpush.bf16.msra.mxu0 %v418
    %934 = vmatpush.bf16.msra.mxu0 %v415
    %935 = vmatpush.bf16.msra.mxu0 %v412
    %936 = vmatmul.bf16.gmra.mxu0 %v914
    %v937 = vpop.f32.mrf.mxu0
    %v938 = vadd.f32 0.0, %v937
    %v939 = vpop.f32.mrf.mxu0
    %940 = vdwg.mxu0
    %941 = vmatpush.bf16.msra.mxu0 %v434
    %942 = vmatpush.bf16.msra.mxu0 %v431
    %943 = vmatpush.bf16.msra.mxu0 %v428
    %944 = vmatpush.bf16.msra.mxu0 %v425
    %945 = vmatpush.bf16.msra.mxu0 %v422
    %946 = vmatpush.bf16.msra.mxu0 %v419
    %947 = vmatpush.bf16.msra.mxu0 %v416
    %948 = vmatpush.bf16.msra.mxu0 %v413
    %949 = vmatmul.bf16.gmra.mxu0 %v914
    %v950 = vpop.f32.mrf.mxu0
    %v951 = vadd.f32 0.0, %v950
    %v952 = vpop.f32.mrf.mxu0
    %953 = vdwg.mxu0
    %v954 = vadd.f32 %v911, %v925
    %v955 = vadd.f32 %v912, %v938
    %v956 = vxor.u32 %v954, 2147483648
    %v957 = vxor.u32 %v955, 2147483648
    %v958 = vmul.f32 %v956, 1.442695
    %v959 = vpow.pop %v958
    %v960 = vmul.f32 %v957, 1.442695
    %v961 = vpow.pop %v960
    %v962 = vadd.f32 %v959, 1.0
    %v963 = vadd.f32 %v961, 1.0
    %v964 = vrcp.pop %v962
    %v965 = vmul.f32 %v962, %v964
    %v966 = vsub.f32 1.0, %v965
    %v967 = vmul.f32 %v964, %v966
    %v968 = vadd.f32 %v964, %v967
    %vm969 = vweird.f32 %v962
    %vm970 = vweird.f32 %v964
    %vm971 = vmor %vm969, %vm970
    %v972 = vsel %vm971, %v964, %v968
    %v973 = vand.u32 2147483647, %v962
    %vm974 = vcmp.eq.f32.partialorder %v973, 8.507059e+37
    %v975 = vand.u32 %v962, 2147483648
    %v976 = vor.u32 1.1754944e-38, %v975
    %v977 = vsel %vm974, %v976, %v972
    %v978 = vmul.f32 1.0, %v977
    %v979 = vrcp.pop %v963
    %v980 = vmul.f32 %v963, %v979
    %v981 = vsub.f32 1.0, %v980
    %v982 = vmul.f32 %v979, %v981
    %v983 = vadd.f32 %v979, %v982
    %vm984 = vweird.f32 %v963
    %vm985 = vweird.f32 %v979
    %vm986 = vmor %vm984, %vm985
    %v987 = vsel %vm986, %v979, %v983
    %v988 = vand.u32 2147483647, %v963
    %vm989 = vcmp.eq.f32.partialorder %v988, 8.507059e+37
    %v990 = vand.u32 %v963, 2147483648
    %v991 = vor.u32 1.1754944e-38, %v990
    %v992 = vsel %vm989, %v991, %v987
    %v993 = vmul.f32 1.0, %v992
    %v994 = vadd.f32 %v951, %v538
    %v995 = vmul.f32 %v978, %v994
    %v996 = vadd.f32 %v913, %v995
    %v997 = vtanh.pop %v996
    %v998 = vsub.f32 1.0, %v993
    %v999 = vmul.f32 %v998, %v997
    %v1000 = vmul.f32 %v993, %v910
    %v1001 = vadd.f32 %v999, %v1000
    %v1002 = vld [vmem:[%s317] sm:$0xff]
    %v1003 = vld [vmem:[%s317 + $0x8] sm:$0xff]
    %v1004 = vld [vmem:[%s317 + $0x10] sm:$0xff]
    %v1005 = vpack.c.bf16 %v1001, %v1001
    %1006 = vmatpush.bf16.msra.mxu0 %v432
    %1007 = vmatpush.bf16.msra.mxu0 %v429
    %1008 = vmatpush.bf16.msra.mxu0 %v426
    %1009 = vmatpush.bf16.msra.mxu0 %v423
    %1010 = vmatpush.bf16.msra.mxu0 %v420
    %1011 = vmatpush.bf16.msra.mxu0 %v417
    %1012 = vmatpush.bf16.msra.mxu0 %v414
    %1013 = vmatpush.bf16.msra.mxu0 %v411
    %1014 = vmatmul.bf16.gmra.mxu0 %v1005
    %v1015 = vpop.f32.mrf.mxu0
    %v1016 = vadd.f32 0.0, %v1015
    %v1017 = vpop.f32.mrf.mxu0
    %1018 = vdwg.mxu0
    %1019 = vmatpush.bf16.msra.mxu0 %v433
    %1020 = vmatpush.bf16.msra.mxu0 %v430
    %1021 = vmatpush.bf16.msra.mxu0 %v427
    %1022 = vmatpush.bf16.msra.mxu0 %v424
    %1023 = vmatpush.bf16.msra.mxu0 %v421
    %1024 = vmatpush.bf16.msra.mxu0 %v418
    %1025 = vmatpush.bf16.msra.mxu0 %v415
    %1026 = vmatpush.bf16.msra.mxu0 %v412
    %1027 = vmatmul.bf16.gmra.mxu0 %v1005
    %v1028 = vpop.f32.mrf.mxu0
    %v1029 = vadd.f32 0.0, %v1028
    %v1030 = vpop.f32.mrf.mxu0
    %1031 = vdwg.mxu0
    %1032 = vmatpush.bf16.msra.mxu0 %v434
    %1033 = vmatpush.bf16.msra.mxu0 %v431
    %1034 = vmatpush.bf16.msra.mxu0 %v428
    %1035 = vmatpush.bf16.msra.mxu0 %v425
    %1036 = vmatpush.bf16.msra.mxu0 %v422
    %1037 = vmatpush.bf16.msra.mxu0 %v419
    %1038 = vmatpush.bf16.msra.mxu0 %v416
    %1039 = vmatpush.bf16.msra.mxu0 %v413
    %1040 = vmatmul.bf16.gmra.mxu0 %v1005
    %v1041 = vpop.f32.mrf.mxu0
    %v1042 = vadd.f32 0.0, %v1041
    %v1043 = vpop.f32.mrf.mxu0
    %1044 = vdwg.mxu0
    %v1045 = vadd.f32 %v1002, %v1016
    %v1046 = vadd.f32 %v1003, %v1029
    %v1047 = vxor.u32 %v1045, 2147483648
    %v1048 = vxor.u32 %v1046, 2147483648
    %v1049 = vmul.f32 %v1047, 1.442695
    %v1050 = vpow.pop %v1049
    %v1051 = vmul.f32 %v1048, 1.442695
    %v1052 = vpow.pop %v1051
    %v1053 = vadd.f32 %v1050, 1.0
    %v1054 = vadd.f32 %v1052, 1.0
    %v1055 = vrcp.pop %v1053
    %v1056 = vmul.f32 %v1053, %v1055
    %v1057 = vsub.f32 1.0, %v1056
    %v1058 = vmul.f32 %v1055, %v1057
    %v1059 = vadd.f32 %v1055, %v1058
    %vm1060 = vweird.f32 %v1053
    %vm1061 = vweird.f32 %v1055
    %vm1062 = vmor %vm1060, %vm1061
    %v1063 = vsel %vm1062, %v1055, %v1059
    %v1064 = vand.u32 2147483647, %v1053
    %vm1065 = vcmp.eq.f32.partialorder %v1064, 8.507059e+37
    %v1066 = vand.u32 %v1053, 2147483648
    %v1067 = vor.u32 1.1754944e-38, %v1066
    %v1068 = vsel %vm1065, %v1067, %v1063
    %v1069 = vmul.f32 1.0, %v1068
    %v1070 = vrcp.pop %v1054
    %v1071 = vmul.f32 %v1054, %v1070
    %v1072 = vsub.f32 1.0, %v1071
    %v1073 = vmul.f32 %v1070, %v1072
    %v1074 = vadd.f32 %v1070, %v1073
    %vm1075 = vweird.f32 %v1054
    %vm1076 = vweird.f32 %v1070
    %vm1077 = vmor %vm1075, %vm1076
    %v1078 = vsel %vm1077, %v1070, %v1074
    %v1079 = vand.u32 2147483647, %v1054
    %vm1080 = vcmp.eq.f32.partialorder %v1079, 8.507059e+37
    %v1081 = vand.u32 %v1054, 2147483648
    %v1082 = vor.u32 1.1754944e-38, %v1081
    %v1083 = vsel %vm1080, %v1082, %v1078
    %v1084 = vmul.f32 1.0, %v1083
    %v1085 = vadd.f32 %v1042, %v538
    %v1086 = vmul.f32 %v1069, %v1085
    %v1087 = vadd.f32 %v1004, %v1086
    %v1088 = vtanh.pop %v1087
    %v1089 = vsub.f32 1.0, %v1084
    %v1090 = vmul.f32 %v1089, %v1088
    %v1091 = vmul.f32 %v1084, %v1001
    %v1092 = vadd.f32 %v1090, %v1091
    %v1093 = vld [vmem:[%s324] sm:$0xff]
    %v1094 = vld [vmem:[%s324 + $0x8] sm:$0xff]
    %v1095 = vld [vmem:[%s324 + $0x10] sm:$0xff]
    %v1096 = vpack.c.bf16 %v1092, %v1092
    %1097 = vmatpush.bf16.msra.mxu0 %v432
    %1098 = vmatpush.bf16.msra.mxu0 %v429
    %1099 = vmatpush.bf16.msra.mxu0 %v426
    %1100 = vmatpush.bf16.msra.mxu0 %v423
    %1101 = vmatpush.bf16.msra.mxu0 %v420
    %1102 = vmatpush.bf16.msra.mxu0 %v417
    %1103 = vmatpush.bf16.msra.mxu0 %v414
    %1104 = vmatpush.bf16.msra.mxu0 %v411
    %1105 = vmatmul.bf16.gmra.mxu0 %v1096
    %v1106 = vpop.f32.mrf.mxu0
    %v1107 = vadd.f32 0.0, %v1106
    %v1108 = vpop.f32.mrf.mxu0
    %1109 = vdwg.mxu0
    %1110 = vmatpush.bf16.msra.mxu0 %v433
    %1111 = vmatpush.bf16.msra.mxu0 %v430
    %1112 = vmatpush.bf16.msra.mxu0 %v427
    %1113 = vmatpush.bf16.msra.mxu0 %v424
    %1114 = vmatpush.bf16.msra.mxu0 %v421
    %1115 = vmatpush.bf16.msra.mxu0 %v418
    %1116 = vmatpush.bf16.msra.mxu0 %v415
    %1117 = vmatpush.bf16.msra.mxu0 %v412
    %1118 = vmatmul.bf16.gmra.mxu0 %v1096
    %v1119 = vpop.f32.mrf.mxu0
    %v1120 = vadd.f32 0.0, %v1119
    %v1121 = vpop.f32.mrf.mxu0
    %1122 = vdwg.mxu0
    %1123 = vmatpush.bf16.msra.mxu0 %v434
    %1124 = vmatpush.bf16.msra.mxu0 %v431
    %1125 = vmatpush.bf16.msra.mxu0 %v428
    %1126 = vmatpush.bf16.msra.mxu0 %v425
    %1127 = vmatpush.bf16.msra.mxu0 %v422
    %1128 = vmatpush.bf16.msra.mxu0 %v419
    %1129 = vmatpush.bf16.msra.mxu0 %v416
    %1130 = vmatpush.bf16.msra.mxu0 %v413
    %1131 = vmatmul.bf16.gmra.mxu0 %v1096
    %v1132 = vpop.f32.mrf.mxu0
    %v1133 = vadd.f32 0.0, %v1132
    %v1134 = vpop.f32.mrf.mxu0
    %1135 = vdwg.mxu0
    %v1136 = vadd.f32 %v1093, %v1107
    %v1137 = vadd.f32 %v1094, %v1120
    %v1138 = vxor.u32 %v1136, 2147483648
    %v1139 = vxor.u32 %v1137, 2147483648
    %v1140 = vmul.f32 %v1138, 1.442695
    %v1141 = vpow.pop %v1140
    %v1142 = vmul.f32 %v1139, 1.442695
    %v1143 = vpow.pop %v1142
    %v1144 = vadd.f32 %v1141, 1.0
    %v1145 = vadd.f32 %v1143, 1.0
    %v1146 = vrcp.pop %v1144
    %v1147 = vmul.f32 %v1144, %v1146
    %v1148 = vsub.f32 1.0, %v1147
    %v1149 = vmul.f32 %v1146, %v1148
    %v1150 = vadd.f32 %v1146, %v1149
    %vm1151 = vweird.f32 %v1144
    %vm1152 = vweird.f32 %v1146
    %vm1153 = vmor %vm1151, %vm1152
    %v1154 = vsel %vm1153, %v1146, %v1150
    %v1155 = vand.u32 2147483647, %v1144
    %vm1156 = vcmp.eq.f32.partialorder %v1155, 8.507059e+37
    %v1157 = vand.u32 %v1144, 2147483648
    %v1158 = vor.u32 1.1754944e-38, %v1157
    %v1159 = vsel %vm1156, %v1158, %v1154
    %v1160 = vmul.f32 1.0, %v1159
    %v1161 = vrcp.pop %v1145
    %v1162 = vmul.f32 %v1145, %v1161
    %v1163 = vsub.f32 1.0, %v1162
    %v1164 = vmul.f32 %v1161, %v1163
    %v1165 = vadd.f32 %v1161, %v1164
    %vm1166 = vweird.f32 %v1145
    %vm1167 = vweird.f32 %v1161
    %vm1168 = vmor %vm1166, %vm1167
    %v1169 = vsel %vm1168, %v1161, %v1165
    %v1170 = vand.u32 2147483647, %v1145
    %vm1171 = vcmp.eq.f32.partialorder %v1170, 8.507059e+37
    %v1172 = vand.u32 %v1145, 2147483648
    %v1173 = vor.u32 1.1754944e-38, %v1172
    %v1174 = vsel %vm1171, %v1173, %v1169
    %v1175 = vmul.f32 1.0, %v1174
    %v1176 = vadd.f32 %v1133, %v538
    %v1177 = vmul.f32 %v1160, %v1176
    %v1178 = vadd.f32 %v1095, %v1177
    %v1179 = vtanh.pop %v1178
    %v1180 = vsub.f32 1.0, %v1175
    %v1181 = vmul.f32 %v1180, %v1179
    %v1182 = vmul.f32 %v1175, %v1092
    %v1183 = vadd.f32 %v1181, %v1182
    %v1184 = vld [vmem:[%s3] sm:$0xff]
    %v1185 = vld [vmem:[%s3 + $0x8] sm:$0xff]
    %v1186 = vld [vmem:[%s3 + $0x10] sm:$0xff]
    %v1187 = vld [vmem:[%s3 + $0x18] sm:$0xff]
    %v1188 = vld [vmem:[%s3 + $0x20] sm:$0xff]
    %v1189 = vld [vmem:[%s3 + $0x28] sm:$0xff]
    %v1190 = vld [vmem:[%s3 + $0x30] sm:$0xff]
    %v1191 = vld [vmem:[%s3 + $0x38] sm:$0xff]
    %v1192 = vld [vmem:[%s3 + $0x40] sm:$0xff]
    %v1193 = vld [vmem:[%s3 + $0x48] sm:$0xff]
    %v1194 = vld [vmem:[%s3 + $0x50] sm:$0xff]
    %v1195 = vld [vmem:[%s3 + $0x58] sm:$0xff]
    %v1196 = vld [vmem:[%s3 + $0x60] sm:$0xff]
    %v1197 = vld [vmem:[%s3 + $0x68] sm:$0xff]
    %v1198 = vld [vmem:[%s3 + $0x70] sm:$0xff]
    %v1199 = vld [vmem:[%s3 + $0x78] sm:$0xff]
    %v1200 = vld [vmem:[%s4] sm:$0x1]
    %v1201 = vperm.slane %v1200, 0
    %1202 = vmatpush.msra.mxu0 %v1199
    %1203 = vmatpush.msra.mxu0 %v1198
    %1204 = vmatpush.msra.mxu0 %v1197
    %1205 = vmatpush.msra.mxu0 %v1196
    %1206 = vmatpush.msra.mxu0 %v1195
    %1207 = vmatpush.msra.mxu0 %v1194
    %1208 = vmatpush.msra.mxu0 %v1193
    %1209 = vmatpush.msra.mxu0 %v1192
    %1210 = vmatpush.msra.mxu0 %v1191
    %1211 = vmatpush.msra.mxu0 %v1190
    %1212 = vmatpush.msra.mxu0 %v1189
    %1213 = vmatpush.msra.mxu0 %v1188
    %1214 = vmatpush.msra.mxu0 %v1187
    %1215 = vmatpush.msra.mxu0 %v1186
    %1216 = vmatpush.msra.mxu0 %v1185
    %1217 = vmatpush.msra.mxu0 %v1184
    %1218 = vmatmul.f32.gmra.mxu0 %v1183
    %v1219 = vpop.f32.mrf.mxu0
    %v1220 = vadd.f32 %v1201, %v1219
    %1221 = vdwg.mxu0
    %v1222 = vmax.f32 %v1220, 0.0
    %v1223 = vld [vmem:[%s4 + $0x1] sm:$0x1]
    %v1224 = vperm.slane %v1223, 0
    %v1225 = vmul.f32 %v1222, %v1224
    %v1226 = vsel %vm130, %v1225, 0.0
    %1227 = vadd.xlane.f32.xlu0 %v1226
    %v1228 = vpop.xlane.xlu0 %1227
    %v1229 = vld [vmem:[%s4 + $0x2] sm:$0x1]
    %v1230 = vperm.slane %v1229, 0
    %v1231 = vadd.f32 %v1228, %v1230
    %vm1232 = vcmask 7168
    %1233 = vst.msk [vmem:[%s5] sm:$0xff] %vm1232, %v1231
    // Predicated region
    $region26: #{tpu_custom_call.1} parent=1 // pred_check
      _
    $region27: #{tpu_custom_call.1} parent=1 // pred_check_branch
      %1235 = sbr.rel (0) target = $region29
    $region28: #{tpu_custom_call.1} parent=1 // pred_region
      _
    $region29: #{tpu_custom_call.1} parent=1 // pred_fallthru
      _
    // Predicated region
    $region30: #{tpu_custom_call.1} parent=1 // pred_check
      _
    $region31: #{tpu_custom_call.1} parent=1 // pred_check_branch
      %1237 = sbr.rel (0) target = $region33
    $region32: #{tpu_custom_call.1} parent=1 // pred_region
      _
    $region33: #{tpu_custom_call.1} parent=1 // pred_fallthru
      _
    %1238 = vsyncpa [#allocation4], 1

</llo_original>
